<compile_context>
chip_gen: v6e
topology: v6e:2x2x1
jax: 0.10.0
libtpu: 0.0.40
codegen_flags: <defaults>
</compile_context>

<pallas_src>
import functools

import jax
import jax.numpy as jnp
from jax.experimental import pallas as pl
from jax.experimental.pallas import tpu as pltpu


def _bottleneck_kernel(xi_ref, xt_ref, xb_ref, w1_ref, s1_ref, b1_ref,
                       w2_ref, s2_ref, b2_ref, w3_ref, s3_ref, b3_ref,
                       o_ref, y1_ref, *, TH, W):
    t = pl.program_id(1)
    n_tiles = pl.num_programs(1)
    THp2 = TH + 2
    Cin = xi_ref.shape[-1]
    P = w1_ref.shape[1]
    Cout = w3_ref.shape[1]

    def conv1(x2d):
        y = jnp.dot(x2d, w1_ref[...], preferred_element_type=jnp.float32)
        return jnp.maximum(y * s1_ref[...] + b1_ref[...], 0.0)

    # ---- conv1 (1x1) + BN1 + ReLU: interior rows + the two halo rows ----
    xi = xi_ref[0].reshape(TH * W, Cin)                       # (TH*W, Cin) bf16
    y1_ref[1:TH + 1] = conv1(xi).astype(jnp.bfloat16).reshape(TH, W, P)

    xh = jnp.concatenate([xt_ref[0, 0], xb_ref[0, 0]], axis=0)  # (2W, Cin)
    y1h = conv1(xh).reshape(2, W, P)
    # Image-boundary halo rows must be exactly zero: conv2's zero padding
    # applies to y1, so neither the BN bias nor the clamped-row data may leak.
    y1_ref[0] = (y1h[0] * (t > 0).astype(jnp.float32)).astype(jnp.bfloat16)
    y1_ref[TH + 1] = (y1h[1] * (t < n_tiles - 1).astype(jnp.float32)
                      ).astype(jnp.bfloat16)

    # ---- conv2 (3x3, stride 1, dil 1, pad 1): 3 dy-accumulated matmuls ----
    y1 = y1_ref[...]                                          # (TH+2, W, P) bf16
    zcol = jnp.zeros((THp2, 1, P), jnp.bfloat16)
    y1_l = jnp.concatenate([zcol, y1[:, :W - 1, :]], axis=1)  # neighbor w-1
    y1_r = jnp.concatenate([y1[:, 1:, :], zcol], axis=1)      # neighbor w+1
    y1_cat = jnp.concatenate([y1_l, y1, y1_r], axis=-1)       # (TH+2, W, 3P)

    def tap(dy):                                              # rows dy .. dy+TH
        return y1_cat[dy:dy + TH].reshape(TH * W, 3 * P)

    y2 = jnp.dot(tap(0), w2_ref[0], preferred_element_type=jnp.float32)
    y2 = y2 + jnp.dot(tap(1), w2_ref[1], preferred_element_type=jnp.float32)
    y2 = y2 + jnp.dot(tap(2), w2_ref[2], preferred_element_type=jnp.float32)
    y2 = jnp.maximum(y2 * s2_ref[...] + b2_ref[...], 0.0)

    # ---- conv3 (1x1) + BN3 + residual add + ReLU ----
    y3 = jnp.dot(y2.astype(jnp.bfloat16), w3_ref[...],
                 preferred_element_type=jnp.float32)
    y3 = y3 * s3_ref[...] + b3_ref[...]
    out = jnp.maximum(y3 + xi.astype(jnp.float32), 0.0)       # residual add
    o_ref[0] = out.reshape(TH, W, Cout).astype(o_ref.dtype)


def _vmem_limits():
    """Generation-aware (limit, tile-picker budget) in bytes."""
    try:
        phys = int(pltpu.get_tpu_info().vmem_capacity_bytes)
    except Exception:
        phys = 64 * 1024 * 1024            # conservative: v7x per-core VMEM
    limit = min(phys * 3 // 4, 100 * 1024 * 1024)   # 48 MiB v7x / 96 MiB v5e,v6e
    return limit, limit // 2


def _tile_vmem_bytes(th, W, cin, planes, cout):
    thp2, ri, re_ = th + 2, th * W, (th + 2) * W
    return (2 * ri * cin * 2            # interior x tile (bf16, double-buffered)
            + 2 * 2 * W * cin * 2       # two 1-row halo views (double-buffered)
            + 2 * ri * cout * 2         # out tile (bf16, double-buffered)
            + re_ * planes * 2          # y1 scratch (bf16)
            + ri * planes * 4           # conv1 f32 result (pre-cast)
            + 2 * re_ * planes * 2      # y1_l / y1_r shifted copies (bf16)
            + re_ * 3 * planes * 2      # y1_cat (bf16)
            + ri * 3 * planes * 2       # one dy tap operand (bf16)
            + ri * planes * 4           # y2 accumulator (f32)
            + ri * cout * 4             # y3 (f32)
            + ri * cin * 4)             # residual in f32


def _pick_tile_rows(H, W, cin, planes, cout, budget_bytes):
    """Largest divisor of H whose live buffers fit the budget (big tiles give
    TH*W >= 256 matmul rows for the 256-wide v6e/v7x MXU and amortize the
    ~0.35us per-grid-step overhead)."""
    divisors = [d for d in range(1, H + 1) if H % d == 0]
    fitting = [d for d in divisors
               if _tile_vmem_bytes(d, W, cin, planes, cout) <= budget_bytes]
    return fitting[-1] if fitting else divisors[0]


def bottleneck_forward(x_nchw, p, tile_h=None):
    N, Cin, H, W = x_nchw.shape
    P = p["w1"].shape[1]
    Cout = p["w3"].shape[1]
    assert Cin == Cout, "downsample=None requires inplanes == planes * expansion"

    vmem_limit, tile_budget = _vmem_limits()
    # Resident weights / BN params (constant index maps); budgeted at 2x since
    # the pipeline still allocates double buffers for them.
    # TODO(synk): mark resident specs pipeline_mode=pl.Buffered(1) once single
    # buffering of constant-index inputs is universally supported.
    resident_bytes = 2 * 2 * (Cin * P + 9 * P * P + P * Cout) + 4 * 4 * (2 * P + Cout)

    if tile_h is None:
        TH = _pick_tile_rows(H, W, Cin, P, Cout, tile_budget - resident_bytes)
    else:
        TH = tile_h
    assert H % TH == 0, "tile_h must divide H"   # TODO(synk): ragged last tile
    n_tiles = H // TH

    # NCHW f32 -> NHWC bf16 in one pass (no pad, no halo replication).
    x = jnp.transpose(x_nchw.astype(jnp.bfloat16), (0, 2, 3, 1))

    args = (
        x, x, x,                                   # interior / top-halo / bottom-halo views
        p["w1"].astype(jnp.bfloat16),
        p["s1"].reshape(1, P), p["b1"].reshape(1, P),
        p["w2_hwio"].reshape(3, 3 * P, P).astype(jnp.bfloat16),   # (kh, kw*cin, cout)
        p["s2"].reshape(1, P), p["b2"].reshape(1, P),
        p["w3"].astype(jnp.bfloat16),
        p["s3"].reshape(1, Cout), p["b3"].reshape(1, Cout),
    )

    def resident(shape):
        z = (0,) * len(shape)
        return pl.BlockSpec(shape, lambda n, t, z=z: z)

    in_specs = [
        # interior TH rows of the tile (auto-pipelined, double-buffered)
        pl.BlockSpec((1, TH, W, Cin), lambda n, t: (n, t, 0, 0)),
        # single-row halo views: image rows t*TH-1 and (t+1)*TH, clamped at the
        # boundary (the fetched row is zeroed post-conv1 by the scalar gate).
        pl.BlockSpec((1, 1, W, Cin),
                     lambda n, t: (n, jnp.maximum(t * TH - 1, 0), 0, 0)),
        pl.BlockSpec((1, 1, W, Cin),
                     lambda n, t: (n, jnp.minimum((t + 1) * TH, H - 1), 0, 0)),
    ] + [resident(a.shape) for a in args[3:]]
    out_specs = pl.BlockSpec((1, TH, W, Cout), lambda n, t: (n, t, 0, 0))

    kernel = functools.partial(_bottleneck_kernel, TH=TH, W=W)
    out = pl.pallas_call(
        kernel,
        out_shape=jax.ShapeDtypeStruct((N, H, W, Cout), jnp.bfloat16),
        grid=(N, n_tiles),
        in_specs=in_specs,
        out_specs=out_specs,
        scratch_shapes=[pltpu.VMEM((TH + 2, W, P), jnp.bfloat16)],
        compiler_params=pltpu.CompilerParams(
            dimension_semantics=("parallel", "parallel"),
            vmem_limit_bytes=int(vmem_limit),
        ),
    )(*args)

    return jnp.transpose(out, (0, 3, 1, 2))        # NHWC -> NCHW (bf16)


def init_params(key, inplanes, planes, eps=1e-5):
    expansion = 4
    ks = jax.random.split(key, 15)
    w1 = 0.1 * jax.random.normal(ks[0], (inplanes, planes), jnp.float32)
    w2_hwio = 0.1 * jax.random.normal(ks[1], (3, 3, planes, planes), jnp.float32)
    w3 = 0.1 * jax.random.normal(ks[2], (planes, planes * expansion), jnp.float32)

    def bn_fold(k0, k1, k2, k3, c):
        gamma = 1.0 + 0.1 * jax.random.normal(k0, (c,), jnp.float32)
        beta = 0.1 * jax.random.normal(k1, (c,), jnp.float32)
        mean = 0.1 * jax.random.normal(k2, (c,), jnp.float32)
        var = jax.random.uniform(k3, (c,), jnp.float32, minval=0.5, maxval=1.5)
        s = gamma * jax.lax.rsqrt(var + eps)
        b = beta - mean * s
        return s, b

    s1, b1 = bn_fold(ks[3], ks[4], ks[5], ks[6], planes)
    s2, b2 = bn_fold(ks[7], ks[8], ks[9], ks[10], planes)
    s3, b3 = bn_fold(ks[11], ks[12], ks[13], ks[14], planes * expansion)
    return dict(w1=w1, w2_hwio=w2_hwio, w3=w3,
                s1=s1, b1=b1, s2=s2, b2=b2, s3=s3, b3=b3)


def ref_bottleneck(x, p, matmul_dtype=jnp.float32):
    """Pure-JAX reference (lax.conv). matmul_dtype=bfloat16 mirrors the kernel's
    bf16 MXU operands with f32 accumulation."""
    def conv(inp, w_hwio, padding=0):
        return jax.lax.conv_general_dilated(
            inp.astype(matmul_dtype), w_hwio.astype(matmul_dtype),
            window_strides=(1, 1),
            padding=[(padding, padding), (padding, padding)],
            dimension_numbers=("NCHW", "HWIO", "NCHW"),
            preferred_element_type=jnp.float32)

    def bn(inp, s, b):
        return inp * s[None, :, None, None] + b[None, :, None, None]

    cin, pp = p["w1"].shape
    w1 = p["w1"].reshape(1, 1, cin, pp)
    w3 = p["w3"].reshape(1, 1, pp, p["w3"].shape[1])

    out = jax.nn.relu(bn(conv(x, w1), p["s1"], p["b1"]))
    out = jax.nn.relu(bn(conv(out, p["w2_hwio"], padding=1), p["s2"], p["b2"]))
    out = bn(conv(out, w3), p["s3"], p["b3"])
    identity = x.astype(matmul_dtype).astype(jnp.float32)
    return jax.nn.relu(out + identity)


if __name__ == "__main__":
    key = jax.random.PRNGKey(0)
    kx, kp = jax.random.split(key)

    # inplanes == planes * expansion so the residual add works with downsample=None.
    inplanes, planes = 128, 32
    N, H, W = 2, 16, 16

    x = jax.random.normal(kx, (N, inplanes, H, W), jnp.float32)
    params = init_params(kp, inplanes, planes)

    ref_bf16 = ref_bottleneck(x, params, matmul_dtype=jnp.bfloat16)
    ref_f32 = ref_bottleneck(x, params, matmul_dtype=jnp.float32)

    # Multi-tile config: exercises the in-kernel halo fetch / boundary gating.
    out_tiled = jax.block_until_ready(
        bottleneck_forward(x, params, tile_h=8)).astype(jnp.float32)
    # Auto-picked tile (whole image per grid step at this size).
    out_auto = jax.block_until_ready(
        bottleneck_forward(x, params)).astype(jnp.float32)

    for name, out in (("tile_h=8", out_tiled), ("auto", out_auto)):
        assert out.shape == ref_bf16.shape
        err_b = float(jnp.max(jnp.abs(out - ref_bf16)))
        err_f = float(jnp.max(jnp.abs(out - ref_f32)))
        assert err_b < 0.1, f"{name}: mismatch vs bf16-operand reference: {err_b}"
        assert err_f < 0.35, f"{name}: mismatch vs f32 reference: {err_f}"

    print("KERNEL_OK")
</pallas_src>

<mosaic_0001>
module attributes {stable_mosaic.version = 11 : i64} {
  func.func @_bottleneck_kernel(%arg0: i32, %arg1: i32, %arg2: memref<1x8x16x128xbf16, #tpu.memory_space<vmem>>, %arg3: memref<1x1x16x128xbf16, #tpu.memory_space<vmem>>, %arg4: memref<1x1x16x128xbf16, #tpu.memory_space<vmem>>, %arg5: memref<128x32xbf16, #tpu.memory_space<vmem>>, %arg6: memref<1x32xf32, #tpu.memory_space<vmem>>, %arg7: memref<1x32xf32, #tpu.memory_space<vmem>>, %arg8: memref<3x96x32xbf16, #tpu.memory_space<vmem>>, %arg9: memref<1x32xf32, #tpu.memory_space<vmem>>, %arg10: memref<1x32xf32, #tpu.memory_space<vmem>>, %arg11: memref<32x128xbf16, #tpu.memory_space<vmem>>, %arg12: memref<1x128xf32, #tpu.memory_space<vmem>>, %arg13: memref<1x128xf32, #tpu.memory_space<vmem>>, %arg14: memref<1x8x16x128xbf16, #tpu.memory_space<vmem>>, %arg15: memref<10x16x32xbf16, #tpu.memory_space<vmem>>) attributes {dimension_semantics = [#tpu.dimension_semantics<parallel>, #tpu.dimension_semantics<parallel>], iteration_bounds = array<i64: 2, 2>, scalar_prefetch = 0 : i64, scratch_operands = 1 : i64, tpu.core_type = #tpu.core_type<tc>, window_params = [{transform_indices = @transform_0, window_bounds = array<i64: 1, 8, 16, 128>}, {transform_indices = @transform_1, window_bounds = array<i64: 1, 1, 16, 128>}, {transform_indices = @transform_2, window_bounds = array<i64: 1, 1, 16, 128>}, {pipeline_mode = #tpu.pipeline_mode<synchronous>, transform_indices = @transform_3, window_bounds = array<i64: 128, 32>}, {pipeline_mode = #tpu.pipeline_mode<synchronous>, transform_indices = @transform_4, window_bounds = array<i64: 1, 32>}, {pipeline_mode = #tpu.pipeline_mode<synchronous>, transform_indices = @transform_5, window_bounds = array<i64: 1, 32>}, {pipeline_mode = #tpu.pipeline_mode<synchronous>, transform_indices = @transform_6, window_bounds = array<i64: 3, 96, 32>}, {pipeline_mode = #tpu.pipeline_mode<synchronous>, transform_indices = @transform_7, window_bounds = array<i64: 1, 32>}, {pipeline_mode = #tpu.pipeline_mode<synchronous>, transform_indices = @transform_8, window_bounds = array<i64: 1, 32>}, {pipeline_mode = #tpu.pipeline_mode<synchronous>, transform_indices = @transform_9, window_bounds = array<i64: 32, 128>}, {pipeline_mode = #tpu.pipeline_mode<synchronous>, transform_indices = @transform_10, window_bounds = array<i64: 1, 128>}, {pipeline_mode = #tpu.pipeline_mode<synchronous>, transform_indices = @transform_11, window_bounds = array<i64: 1, 128>}, {transform_indices = @transform_12, window_bounds = array<i64: 1, 8, 16, 128>}]} {
    %c0 = arith.constant 0 : index
    %c0_0 = arith.constant 0 : index
    %c0_1 = arith.constant 0 : index
    %c0_2 = arith.constant 0 : index
    %0 = vector.load %arg2[%c0, %c0_0, %c0_1, %c0_2] : memref<1x8x16x128xbf16, #tpu.memory_space<vmem>>, vector<1x8x16x128xbf16>
    %1 = vector.shape_cast %0 : vector<1x8x16x128xbf16> to vector<8x16x128xbf16>
    %2 = vector.shape_cast %1 : vector<8x16x128xbf16> to vector<128x128xbf16>
    %c0_3 = arith.constant 0 : index
    %c0_4 = arith.constant 0 : index
    %3 = vector.load %arg5[%c0_3, %c0_4] : memref<128x32xbf16, #tpu.memory_space<vmem>>, vector<128x32xbf16>
    %cst = arith.constant dense<0.000000e+00> : vector<128x32xf32>
    %4 = tpu.matmul %2, %3, %cst {dimension_numbers = #tpu.dot_dimension_numbers<[1], [0], [0], [1], [0, 0, 1, 1], [], []>} : vector<128x128xbf16>, vector<128x32xbf16>, vector<128x32xf32> -> vector<128x32xf32>
    %c0_5 = arith.constant 0 : index
    %c0_6 = arith.constant 0 : index
    %5 = vector.load %arg6[%c0_5, %c0_6] : memref<1x32xf32, #tpu.memory_space<vmem>>, vector<1x32xf32>
    %6 = vector.broadcast %5 : vector<1x32xf32> to vector<128x32xf32>
    %7 = arith.mulf %4, %6 : vector<128x32xf32>
    %c0_7 = arith.constant 0 : index
    %c0_8 = arith.constant 0 : index
    %8 = vector.load %arg7[%c0_7, %c0_8] : memref<1x32xf32, #tpu.memory_space<vmem>>, vector<1x32xf32>
    %9 = vector.broadcast %8 : vector<1x32xf32> to vector<128x32xf32>
    %10 = arith.addf %7, %9 : vector<128x32xf32>
    %cst_9 = arith.constant 0.000000e+00 : f32
    %11 = vector.broadcast %cst_9 : f32 to vector<128x32xf32>
    %12 = arith.maximumf %10, %11 : vector<128x32xf32>
    %13 = arith.truncf %12 : vector<128x32xf32> to vector<128x32xbf16>
    %14 = vector.shape_cast %13 : vector<128x32xbf16> to vector<8x16x32xbf16>
    %c1 = arith.constant 1 : index
    %c0_10 = arith.constant 0 : index
    %c0_11 = arith.constant 0 : index
    %15 = vector.load %arg15[%c1, %c0_10, %c0_11] : memref<10x16x32xbf16, #tpu.memory_space<vmem>>, vector<8x16x32xbf16>
    tpu.vector_store %arg15[%c1, %c0_10, %c0_11], %14 {strides = array<i32>} : memref<10x16x32xbf16, #tpu.memory_space<vmem>>, vector<8x16x32xbf16>,
    %c0_12 = arith.constant 0 : index
    %c0_13 = arith.constant 0 : index
    %c0_14 = arith.constant 0 : index
    %c0_15 = arith.constant 0 : index
    %16 = vector.load %arg3[%c0_12, %c0_13, %c0_14, %c0_15] : memref<1x1x16x128xbf16, #tpu.memory_space<vmem>>, vector<1x1x16x128xbf16>
    %17 = vector.shape_cast %16 : vector<1x1x16x128xbf16> to vector<16x128xbf16>
    %c0_16 = arith.constant 0 : index
    %c0_17 = arith.constant 0 : index
    %c0_18 = arith.constant 0 : index
    %c0_19 = arith.constant 0 : index
    %18 = vector.load %arg4[%c0_16, %c0_17, %c0_18, %c0_19] : memref<1x1x16x128xbf16, #tpu.memory_space<vmem>>, vector<1x1x16x128xbf16>
    %19 = vector.shape_cast %18 : vector<1x1x16x128xbf16> to vector<16x128xbf16>
    %20 = tpu.concatenate %17, %19 in 0 : vector<16x128xbf16>, vector<16x128xbf16> -> vector<32x128xbf16>
    %c0_20 = arith.constant 0 : index
    %c0_21 = arith.constant 0 : index
    %21 = vector.load %arg5[%c0_20, %c0_21] : memref<128x32xbf16, #tpu.memory_space<vmem>>, vector<128x32xbf16>
    %cst_22 = arith.constant dense<0.000000e+00> : vector<32x32xf32>
    %22 = tpu.matmul %20, %21, %cst_22 {dimension_numbers = #tpu.dot_dimension_numbers<[1], [0], [0], [1], [0, 0, 1, 1], [], []>} : vector<32x128xbf16>, vector<128x32xbf16>, vector<32x32xf32> -> vector<32x32xf32>
    %c0_23 = arith.constant 0 : index
    %c0_24 = arith.constant 0 : index
    %23 = vector.load %arg6[%c0_23, %c0_24] : memref<1x32xf32, #tpu.memory_space<vmem>>, vector<1x32xf32>
    %24 = vector.broadcast %23 : vector<1x32xf32> to vector<32x32xf32>
    %25 = arith.mulf %22, %24 : vector<32x32xf32>
    %c0_25 = arith.constant 0 : index
    %c0_26 = arith.constant 0 : index
    %26 = vector.load %arg7[%c0_25, %c0_26] : memref<1x32xf32, #tpu.memory_space<vmem>>, vector<1x32xf32>
    %27 = vector.broadcast %26 : vector<1x32xf32> to vector<32x32xf32>
    %28 = arith.addf %25, %27 : vector<32x32xf32>
    %cst_27 = arith.constant 0.000000e+00 : f32
    %29 = vector.broadcast %cst_27 : f32 to vector<32x32xf32>
    %30 = arith.maximumf %28, %29 : vector<32x32xf32>
    %31 = vector.shape_cast %30 : vector<32x32xf32> to vector<2x16x32xf32>
    %32 = vector.extract_strided_slice %31 {offsets = [0, 0, 0], sizes = [1, 16, 32], strides = [1, 1, 1]} : vector<2x16x32xf32> to vector<1x16x32xf32>
    %33 = vector.shape_cast %32 : vector<1x16x32xf32> to vector<16x32xf32>
    %c0_i32 = arith.constant 0 : i32
    %34 = arith.cmpi sgt, %arg1, %c0_i32 : i32
    %35 = arith.extui %34 : i1 to i32
    %36 = arith.sitofp %35 : i32 to f32
    %37 = vector.broadcast %36 : f32 to vector<16x32xf32>
    %38 = arith.mulf %33, %37 : vector<16x32xf32>
    %39 = arith.truncf %38 : vector<16x32xf32> to vector<16x32xbf16>
    %c0_28 = arith.constant 0 : index
    %c0_29 = arith.constant 0 : index
    %c0_30 = arith.constant 0 : index
    %40 = vector.load %arg15[%c0_28, %c0_29, %c0_30] : memref<10x16x32xbf16, #tpu.memory_space<vmem>>, vector<1x16x32xbf16>
    %41 = vector.shape_cast %40 : vector<1x16x32xbf16> to vector<16x32xbf16>
    %42 = vector.shape_cast %39 : vector<16x32xbf16> to vector<1x16x32xbf16>
    tpu.vector_store %arg15[%c0_28, %c0_29, %c0_30], %42 {strides = array<i32>} : memref<10x16x32xbf16, #tpu.memory_space<vmem>>, vector<1x16x32xbf16>,
    %43 = vector.extract_strided_slice %31 {offsets = [1, 0, 0], sizes = [1, 16, 32], strides = [1, 1, 1]} : vector<2x16x32xf32> to vector<1x16x32xf32>
    %44 = vector.shape_cast %43 : vector<1x16x32xf32> to vector<16x32xf32>
    %c1_i32 = arith.constant 1 : i32
    %45 = arith.cmpi slt, %arg1, %c1_i32 : i32
    %46 = arith.extui %45 : i1 to i32
    %47 = arith.sitofp %46 : i32 to f32
    %48 = vector.broadcast %47 : f32 to vector<16x32xf32>
    %49 = arith.mulf %44, %48 : vector<16x32xf32>
    %50 = arith.truncf %49 : vector<16x32xf32> to vector<16x32xbf16>
    %c9 = arith.constant 9 : index
    %c0_31 = arith.constant 0 : index
    %c0_32 = arith.constant 0 : index
    %51 = vector.load %arg15[%c9, %c0_31, %c0_32] : memref<10x16x32xbf16, #tpu.memory_space<vmem>>, vector<1x16x32xbf16>
    %52 = vector.shape_cast %51 : vector<1x16x32xbf16> to vector<16x32xbf16>
    %53 = vector.shape_cast %50 : vector<16x32xbf16> to vector<1x16x32xbf16>
    tpu.vector_store %arg15[%c9, %c0_31, %c0_32], %53 {strides = array<i32>} : memref<10x16x32xbf16, #tpu.memory_space<vmem>>, vector<1x16x32xbf16>,
    %c0_33 = arith.constant 0 : index
    %c0_34 = arith.constant 0 : index
    %c0_35 = arith.constant 0 : index
    %54 = vector.load %arg15[%c0_33, %c0_34, %c0_35] : memref<10x16x32xbf16, #tpu.memory_space<vmem>>, vector<10x16x32xbf16>
    %cst_36 = arith.constant 0.000000e+00 : bf16
    %55 = vector.broadcast %cst_36 : bf16 to vector<10x1x32xbf16>
    %56 = vector.extract_strided_slice %54 {offsets = [0, 0, 0], sizes = [10, 15, 32], strides = [1, 1, 1]} : vector<10x16x32xbf16> to vector<10x15x32xbf16>
    %57 = tpu.concatenate %55, %56 in 1 : vector<10x1x32xbf16>, vector<10x15x32xbf16> -> vector<10x16x32xbf16>
    %58 = vector.extract_strided_slice %54 {offsets = [0, 1, 0], sizes = [10, 15, 32], strides = [1, 1, 1]} : vector<10x16x32xbf16> to vector<10x15x32xbf16>
    %59 = tpu.concatenate %58, %55 in 1 : vector<10x15x32xbf16>, vector<10x1x32xbf16> -> vector<10x16x32xbf16>
    %60 = tpu.concatenate %57, %54, %59 in 2 : vector<10x16x32xbf16>, vector<10x16x32xbf16>, vector<10x16x32xbf16> -> vector<10x16x96xbf16>
    %61 = vector.extract_strided_slice %60 {offsets = [0, 0, 0], sizes = [8, 16, 96], strides = [1, 1, 1]} : vector<10x16x96xbf16> to vector<8x16x96xbf16>
    %62 = vector.shape_cast %61 : vector<8x16x96xbf16> to vector<128x96xbf16>
    %c0_37 = arith.constant 0 : index
    %c0_38 = arith.constant 0 : index
    %c0_39 = arith.constant 0 : index
    %63 = vector.load %arg8[%c0_37, %c0_38, %c0_39] : memref<3x96x32xbf16, #tpu.memory_space<vmem>>, vector<1x96x32xbf16>
    %64 = vector.shape_cast %63 : vector<1x96x32xbf16> to vector<96x32xbf16>
    %cst_40 = arith.constant dense<0.000000e+00> : vector<128x32xf32>
    %65 = tpu.matmul %62, %64, %cst_40 {dimension_numbers = #tpu.dot_dimension_numbers<[1], [0], [0], [1], [0, 0, 1, 1], [], []>} : vector<128x96xbf16>, vector<96x32xbf16>, vector<128x32xf32> -> vector<128x32xf32>
    %66 = vector.extract_strided_slice %60 {offsets = [1, 0, 0], sizes = [8, 16, 96], strides = [1, 1, 1]} : vector<10x16x96xbf16> to vector<8x16x96xbf16>
    %67 = vector.shape_cast %66 : vector<8x16x96xbf16> to vector<128x96xbf16>
    %c1_41 = arith.constant 1 : index
    %c0_42 = arith.constant 0 : index
    %c0_43 = arith.constant 0 : index
    %68 = vector.load %arg8[%c1_41, %c0_42, %c0_43] : memref<3x96x32xbf16, #tpu.memory_space<vmem>>, vector<1x96x32xbf16>
    %69 = vector.shape_cast %68 : vector<1x96x32xbf16> to vector<96x32xbf16>
    %cst_44 = arith.constant dense<0.000000e+00> : vector<128x32xf32>
    %70 = tpu.matmul %67, %69, %cst_44 {dimension_numbers = #tpu.dot_dimension_numbers<[1], [0], [0], [1], [0, 0, 1, 1], [], []>} : vector<128x96xbf16>, vector<96x32xbf16>, vector<128x32xf32> -> vector<128x32xf32>
    %71 = arith.addf %65, %70 : vector<128x32xf32>
    %72 = vector.extract_strided_slice %60 {offsets = [2, 0, 0], sizes = [8, 16, 96], strides = [1, 1, 1]} : vector<10x16x96xbf16> to vector<8x16x96xbf16>
    %73 = vector.shape_cast %72 : vector<8x16x96xbf16> to vector<128x96xbf16>
    %c2 = arith.constant 2 : index
    %c0_45 = arith.constant 0 : index
    %c0_46 = arith.constant 0 : index
    %74 = vector.load %arg8[%c2, %c0_45, %c0_46] : memref<3x96x32xbf16, #tpu.memory_space<vmem>>, vector<1x96x32xbf16>
    %75 = vector.shape_cast %74 : vector<1x96x32xbf16> to vector<96x32xbf16>
    %cst_47 = arith.constant dense<0.000000e+00> : vector<128x32xf32>
    %76 = tpu.matmul %73, %75, %cst_47 {dimension_numbers = #tpu.dot_dimension_numbers<[1], [0], [0], [1], [0, 0, 1, 1], [], []>} : vector<128x96xbf16>, vector<96x32xbf16>, vector<128x32xf32> -> vector<128x32xf32>
    %77 = arith.addf %71, %76 : vector<128x32xf32>
    %c0_48 = arith.constant 0 : index
    %c0_49 = arith.constant 0 : index
    %78 = vector.load %arg9[%c0_48, %c0_49] : memref<1x32xf32, #tpu.memory_space<vmem>>, vector<1x32xf32>
    %79 = vector.broadcast %78 : vector<1x32xf32> to vector<128x32xf32>
    %80 = arith.mulf %77, %79 : vector<128x32xf32>
    %c0_50 = arith.constant 0 : index
    %c0_51 = arith.constant 0 : index
    %81 = vector.load %arg10[%c0_50, %c0_51] : memref<1x32xf32, #tpu.memory_space<vmem>>, vector<1x32xf32>
    %82 = vector.broadcast %81 : vector<1x32xf32> to vector<128x32xf32>
    %83 = arith.addf %80, %82 : vector<128x32xf32>
    %cst_52 = arith.constant 0.000000e+00 : f32
    %84 = vector.broadcast %cst_52 : f32 to vector<128x32xf32>
    %85 = arith.maximumf %83, %84 : vector<128x32xf32>
    %86 = arith.truncf %85 : vector<128x32xf32> to vector<128x32xbf16>
    %c0_53 = arith.constant 0 : index
    %c0_54 = arith.constant 0 : index
    %87 = vector.load %arg11[%c0_53, %c0_54] : memref<32x128xbf16, #tpu.memory_space<vmem>>, vector<32x128xbf16>
    %cst_55 = arith.constant dense<0.000000e+00> : vector<128x128xf32>
    %88 = tpu.matmul %86, %87, %cst_55 {dimension_numbers = #tpu.dot_dimension_numbers<[1], [0], [0], [1], [0, 0, 1, 1], [], []>} : vector<128x32xbf16>, vector<32x128xbf16>, vector<128x128xf32> -> vector<128x128xf32>
    %c0_56 = arith.constant 0 : index
    %c0_57 = arith.constant 0 : index
    %89 = vector.load %arg12[%c0_56, %c0_57] : memref<1x128xf32, #tpu.memory_space<vmem>>, vector<1x128xf32>
    %90 = vector.broadcast %89 : vector<1x128xf32> to vector<128x128xf32>
    %91 = arith.mulf %88, %90 : vector<128x128xf32>
    %c0_58 = arith.constant 0 : index
    %c0_59 = arith.constant 0 : index
    %92 = vector.load %arg13[%c0_58, %c0_59] : memref<1x128xf32, #tpu.memory_space<vmem>>, vector<1x128xf32>
    %93 = vector.broadcast %92 : vector<1x128xf32> to vector<128x128xf32>
    %94 = arith.addf %91, %93 : vector<128x128xf32>
    %95 = arith.extf %2 : vector<128x128xbf16> to vector<128x128xf32>
    %96 = arith.addf %94, %95 : vector<128x128xf32>
    %cst_60 = arith.constant 0.000000e+00 : f32
    %97 = vector.broadcast %cst_60 : f32 to vector<128x128xf32>
    %98 = arith.maximumf %96, %97 : vector<128x128xf32>
    %99 = vector.shape_cast %98 : vector<128x128xf32> to vector<8x16x128xf32>
    %100 = arith.truncf %99 : vector<8x16x128xf32> to vector<8x16x128xbf16>
    %c0_61 = arith.constant 0 : index
    %c0_62 = arith.constant 0 : index
    %c0_63 = arith.constant 0 : index
    %c0_64 = arith.constant 0 : index
    %101 = vector.load %arg14[%c0_61, %c0_62, %c0_63, %c0_64] : memref<1x8x16x128xbf16, #tpu.memory_space<vmem>>, vector<1x8x16x128xbf16>
    %102 = vector.shape_cast %101 : vector<1x8x16x128xbf16> to vector<8x16x128xbf16>
    %103 = vector.shape_cast %100 : vector<8x16x128xbf16> to vector<1x8x16x128xbf16>
    tpu.vector_store %arg14[%c0_61, %c0_62, %c0_63, %c0_64], %103 {strides = array<i32>} : memref<1x8x16x128xbf16, #tpu.memory_space<vmem>>, vector<1x8x16x128xbf16>,
    return
  }
  func.func @transform_0(%arg0: i32, %arg1: i32) -> (i32, i32, i32, i32) {
    %c0_i32 = arith.constant 0 : i32
    %c0_i32_0 = arith.constant 0 : i32
    %c0_i32_1 = arith.constant 0 : i32
    return %arg0, %arg1, %c0_i32, %c0_i32_0 : i32, i32, i32, i32
  }
  func.func @transform_1(%arg0: i32, %arg1: i32) -> (i32, i32, i32, i32) {
    %c8_i32 = arith.constant 8 : i32
    %0 = arith.muli %arg1, %c8_i32 : i32
    %c1_i32 = arith.constant 1 : i32
    %1 = arith.subi %0, %c1_i32 : i32
    %c0_i32 = arith.constant 0 : i32
    %2 = arith.maxsi %1, %c0_i32 : i32
    %c0_i32_0 = arith.constant 0 : i32
    %c0_i32_1 = arith.constant 0 : i32
    %c0_i32_2 = arith.constant 0 : i32
    return %arg0, %2, %c0_i32_0, %c0_i32_1 : i32, i32, i32, i32
  }
  func.func @transform_2(%arg0: i32, %arg1: i32) -> (i32, i32, i32, i32) {
    %c1_i32 = arith.constant 1 : i32
    %0 = arith.addi %arg1, %c1_i32 : i32
    %c8_i32 = arith.constant 8 : i32
    %1 = arith.muli %0, %c8_i32 : i32
    %c15_i32 = arith.constant 15 : i32
    %2 = arith.minsi %1, %c15_i32 : i32
    %c0_i32 = arith.constant 0 : i32
    %c0_i32_0 = arith.constant 0 : i32
    %c0_i32_1 = arith.constant 0 : i32
    return %arg0, %2, %c0_i32, %c0_i32_0 : i32, i32, i32, i32
  }
  func.func @transform_3(%arg0: i32, %arg1: i32) -> (i32, i32) {
    %c0_i32 = arith.constant 0 : i32
    %c0_i32_0 = arith.constant 0 : i32
    %c0_i32_1 = arith.constant 0 : i32
    return %c0_i32, %c0_i32_0 : i32, i32
  }
  func.func @transform_4(%arg0: i32, %arg1: i32) -> (i32, i32) {
    %c0_i32 = arith.constant 0 : i32
    %c0_i32_0 = arith.constant 0 : i32
    %c0_i32_1 = arith.constant 0 : i32
    return %c0_i32, %c0_i32_0 : i32, i32
  }
  func.func @transform_5(%arg0: i32, %arg1: i32) -> (i32, i32) {
    %c0_i32 = arith.constant 0 : i32
    %c0_i32_0 = arith.constant 0 : i32
    %c0_i32_1 = arith.constant 0 : i32
    return %c0_i32, %c0_i32_0 : i32, i32
  }
  func.func @transform_6(%arg0: i32, %arg1: i32) -> (i32, i32, i32) {
    %c0_i32 = arith.constant 0 : i32
    %c0_i32_0 = arith.constant 0 : i32
    %c0_i32_1 = arith.constant 0 : i32
    %c0_i32_2 = arith.constant 0 : i32
    return %c0_i32, %c0_i32_0, %c0_i32_1 : i32, i32, i32
  }
  func.func @transform_7(%arg0: i32, %arg1: i32) -> (i32, i32) {
    %c0_i32 = arith.constant 0 : i32
    %c0_i32_0 = arith.constant 0 : i32
    %c0_i32_1 = arith.constant 0 : i32
    return %c0_i32, %c0_i32_0 : i32, i32
  }
  func.func @transform_8(%arg0: i32, %arg1: i32) -> (i32, i32) {
    %c0_i32 = arith.constant 0 : i32
    %c0_i32_0 = arith.constant 0 : i32
    %c0_i32_1 = arith.constant 0 : i32
    return %c0_i32, %c0_i32_0 : i32, i32
  }
  func.func @transform_9(%arg0: i32, %arg1: i32) -> (i32, i32) {
    %c0_i32 = arith.constant 0 : i32
    %c0_i32_0 = arith.constant 0 : i32
    %c0_i32_1 = arith.constant 0 : i32
    return %c0_i32, %c0_i32_0 : i32, i32
  }
  func.func @transform_10(%arg0: i32, %arg1: i32) -> (i32, i32) {
    %c0_i32 = arith.constant 0 : i32
    %c0_i32_0 = arith.constant 0 : i32
    %c0_i32_1 = arith.constant 0 : i32
    return %c0_i32, %c0_i32_0 : i32, i32
  }
  func.func @transform_11(%arg0: i32, %arg1: i32) -> (i32, i32) {
    %c0_i32 = arith.constant 0 : i32
    %c0_i32_0 = arith.constant 0 : i32
    %c0_i32_1 = arith.constant 0 : i32
    return %c0_i32, %c0_i32_0 : i32, i32
  }
  func.func @transform_12(%arg0: i32, %arg1: i32) -> (i32, i32, i32, i32) {
    %c0_i32 = arith.constant 0 : i32
    %c0_i32_0 = arith.constant 0 : i32
    %c0_i32_1 = arith.constant 0 : i32
    return %arg0, %arg1, %c0_i32, %c0_i32_0 : i32, i32, i32, i32
  }
}

</mosaic_0001>

<llo_original>
// kernel: tpu_custom_call.1
$region0: #{tpu_custom_call.1}
  #allocation0 [shape = 'u32[]', space=smem, size = 0x4, offset = 0x4, fixed_abs, tag = 'smem constant byte address 0x4 - core index']
  #allocation1 [shape = 'u32[144,128]{1,0:T(1,128)}', space=vmem, size = 0x12000, scoped, tag = 'internal scratch']
  #allocation2 [shape = 'bf16[10,16,32]{2,1,0:T(8,128)(2,1)}', space=vmem, size = 0xa000, scoped, tag = 'scratch operand']
  %s0 = inlined_call_operand.vmem [shape: bf16[2,16,16,128], index: 0, kind: input, shape index: {}]
  %s1 = inlined_call_operand.hbm [shape: bf16[2,16,16,128], index: 1, kind: input, shape index: {}]
  %s2 = inlined_call_operand.hbm [shape: bf16[2,16,16,128], index: 2, kind: input, shape index: {}]
  %s3 = inlined_call_operand.vmem [shape: bf16[128,32], index: 3, kind: input, shape index: {}]
  %s4 = inlined_call_operand.vmem [shape: f32[1,32], index: 4, kind: input, shape index: {}]
  %s5 = inlined_call_operand.vmem [shape: f32[1,32], index: 5, kind: input, shape index: {}]
  %s6 = inlined_call_operand.vmem [shape: bf16[3,96,32], index: 6, kind: input, shape index: {}]
  %s7 = inlined_call_operand.vmem [shape: f32[1,32], index: 7, kind: input, shape index: {}]
  %s8 = inlined_call_operand.vmem [shape: f32[1,32], index: 8, kind: input, shape index: {}]
  %s9 = inlined_call_operand.vmem [shape: bf16[32,128], index: 9, kind: input, shape index: {}]
  %s10 = inlined_call_operand.vmem [shape: f32[1,128], index: 10, kind: input, shape index: {}]
  %s11 = inlined_call_operand.vmem [shape: f32[1,128], index: 11, kind: input, shape index: {}]
  %s12 = inlined_call_operand.hbm [shape: bf16[2,16,16,128], index: 12, kind: output, shape index: {}]
  %s13 = sld [smem:[#allocation0]]
  $region89: #{tpu_custom_call.1} parent=0
    _
  %s15 = ssub.s32 1, %s13
  %s16 = scalar_select 0, %s15, %s13
  $region1: #{tpu_custom_call.1} parent=0
    #allocation3 [shape = 'u8[8192]{0}', space=vmem, size = 0x2000, scoped, tag = 'input window, operand 1']
    #allocation4 [shape = 's32[2]{0}', space=sflag, size = 0x8, scoped, tag = 'scoped memory for tpu_custom_call.1']
    #allocation5 [shape = 's32[2]{0}', space=sflag, size = 0x8, scoped, tag = 'scoped memory for tpu_custom_call.1']
    #allocation6 [shape = 'u8[8192]{0}', space=vmem, size = 0x2000, scoped, tag = 'input window, operand 2']
    #allocation7 [shape = 's32[2]{0}', space=sflag, size = 0x8, scoped, tag = 'scoped memory for tpu_custom_call.1']
    #allocation8 [shape = 'u8[65536]{0}', space=vmem, size = 0x10000, scoped, tag = 'output window, operand 0']
    %17 = vsyncpa [#allocation4], 0
    %s18 = scalar_lea.sflag [#allocation4], 1
    %19 = vsyncpa %s18, 0
    %20 = vsyncpa [#allocation7], 0
    %s21 = scalar_lea.sflag [#allocation7], 1
    %22 = vsyncpa %s21, 0
    %23 = vsyncpa [#allocation5], 0
    %s24 = scalar_lea.sflag [#allocation5], 1
    %25 = vsyncpa %s24, 0
    loop: start=0, step=1, limit=6
    $region2: #{tpu_custom_call.1} parent=1 // loop_pre_header
      _
    $region3: #{tpu_custom_call.1} parent=1 // loop_header
      %s27 = sphi 0, %s31
      %p28 = scmp.ge.s32.totalorder %s27, 6
      %s34 = sphi 0, %s46
      %s35 = sphi 0, %s42
      %s36 = sphi 0, %s34
      %s37 = sphi 0, %s35
      %s38 = sphi 0, %s36
      %s39 = sphi 0, %s37
      %s51 = sphi 0, %s53
      %s54 = sphi 0, %s51
      %s55 = sphi 0, %s54
      %s71 = sphi 0, %s55
      %s87 = sphi 0, %s89
      %s90 = sphi 0, %s87
      %s91 = sphi 0, %s90
      %s107 = sphi 0, %s91
      %s123 = sphi 0, %s125
      %s126 = sphi 0, %s123
      %s127 = sphi 0, %s126
      %s143 = sphi 0, %s127
      %s147 = sphi 0, %s147
      %s149 = sphi 0, %s147
      %s150 = sphi 0, %s149
      %s164 = sphi 0, %s150
      %s168 = sphi 0, %s168
      %s170 = sphi 0, %s168
      %s171 = sphi 0, %s170
      %s185 = sphi 0, %s171
      %s189 = sphi 0, %s189
      %s191 = sphi 0, %s189
      %s192 = sphi 0, %s191
      %s206 = sphi 0, %s192
      %s210 = sphi 0, %s210
      %s212 = sphi 0, %s210
      %s213 = sphi 0, %s212
      %s227 = sphi 0, %s213
      %s231 = sphi 0, %s231
      %s233 = sphi 0, %s231
      %s234 = sphi 0, %s233
      %s248 = sphi 0, %s234
      %s252 = sphi 0, %s252
      %s254 = sphi 0, %s252
      %s255 = sphi 0, %s254
      %s269 = sphi 0, %s255
      %s273 = sphi 0, %s273
      %s275 = sphi 0, %s273
      %s276 = sphi 0, %s275
      %s290 = sphi 0, %s276
      %s294 = sphi 0, %s294
      %s296 = sphi 0, %s294
      %s297 = sphi 0, %s296
      %s311 = sphi 0, %s297
      %s315 = sphi 0, %s315
      %s317 = sphi 0, %s315
      %s318 = sphi 0, %s317
      %s332 = sphi 0, %s318
      %s340 = sphi 0, %s342
      %s343 = sphi 0, %s340
      %s344 = sphi 0, %s343
      %s360 = sphi 0, %s344
    $region4: #{tpu_custom_call.1} parent=1 // loop_header_branch
      %30 = sbr.rel (%p28) target = $region8
    $region5: #{tpu_custom_call.1} parent=1 // loop_body
      %s32 = ssub.s32 %s27, 1
      %s33 = ssub.s32 %s27, 2
      %s40 = sadd.s32 1, %s35
      %p41 = scmp.ge.s32.totalorder %s40, 2
      %s42 = scalar_select %p41, 0, %s40
      %s43 = sadd.s32 1, %s34
      %s44 = scalar_select %p41, %s43, %s34
      %p45 = scmp.ge.s32.totalorder %s44, 2
      %s46 = scalar_select %p45, 0, %s44
      %s47 = ssub.s32 %s34, %s46
      %s48 = ssub.s32 %s35, %s42
      %s49 = sor.u32 %s47, %s48
      %p50 = scmp.eq.s32.totalorder %s49, 0
      %s52 = sadd.s32 %s51, 1
      %s53 = scalar_select %p50, %s51, %s52
      %p56 = pneg %p50
      %p57 = scmp.eq.s32.totalorder %s27, 3
      %p58 = por %p56, %p57
      %p59 = scmp.ne.s32.totalorder %s51, %s54
      %p60 = scmp.eq.s32.totalorder %s27, 0
      %p61 = por %p59, %p60
      %p62 = scmp.ne.s32.totalorder %s51, %s54
      %p63 = scmp.eq.s32.totalorder %s32, 3
      %p64 = por %p62, %p63
      %p65 = scmp.ne.s32.totalorder %s54, %s55
      %p66 = scmp.eq.s32.totalorder %s32, 0
      %p67 = por %p65, %p66
      %p68 = scmp.ne.s32.totalorder %s54, %s55
      %p69 = scmp.eq.s32.totalorder %s33, 3
      %p70 = por %p68, %p69
      %p72 = scmp.ne.s32.totalorder %s55, %s71
      %p73 = scmp.eq.s32.totalorder %s33, 0
      %p74 = por %p72, %p73
      %s75 = smul.u32 %s35, 8
      %s76 = ssub.s32 %s75, 1
      %p77 = scmp.gt.s32.totalorder %s76, 0
      %s78 = scalar_select %p77, %s76, 0
      %s79 = smul.u32 %s42, 8
      %s80 = ssub.s32 %s79, 1
      %p81 = scmp.gt.s32.totalorder %s80, 0
      %s82 = scalar_select %p81, %s80, 0
      %s83 = ssub.s32 %s34, %s46
      %s84 = ssub.s32 %s78, %s82
      %s85 = sor.u32 %s83, %s84
      %p86 = scmp.eq.s32.totalorder %s85, 0
      %s88 = sadd.s32 %s87, 1
      %s89 = scalar_select %p86, %s87, %s88
      %p92 = pneg %p86
      %p93 = scmp.eq.s32.totalorder %s27, 3
      %p94 = por %p92, %p93
      %p95 = scmp.ne.s32.totalorder %s87, %s90
      %p96 = scmp.eq.s32.totalorder %s27, 0
      %p97 = por %p95, %p96
      %p98 = scmp.ne.s32.totalorder %s87, %s90
      %p99 = scmp.eq.s32.totalorder %s32, 3
      %p100 = por %p98, %p99
      %p101 = scmp.ne.s32.totalorder %s90, %s91
      %p102 = scmp.eq.s32.totalorder %s32, 0
      %p103 = por %p101, %p102
      %p104 = scmp.ne.s32.totalorder %s90, %s91
      %p105 = scmp.eq.s32.totalorder %s33, 3
      %p106 = por %p104, %p105
      %p108 = scmp.ne.s32.totalorder %s91, %s107
      %p109 = scmp.eq.s32.totalorder %s33, 0
      %p110 = por %p108, %p109
      %s111 = sadd.s32 %s35, 1
      %s112 = smul.u32 %s111, 8
      %p113 = scmp.lt.s32.totalorder %s112, 15
      %s114 = scalar_select %p113, %s112, 15
      %s115 = sadd.s32 %s42, 1
      %s116 = smul.u32 %s115, 8
      %p117 = scmp.lt.s32.totalorder %s116, 15
      %s118 = scalar_select %p117, %s116, 15
      %s119 = ssub.s32 %s34, %s46
      %s120 = ssub.s32 %s114, %s118
      %s121 = sor.u32 %s119, %s120
      %p122 = scmp.eq.s32.totalorder %s121, 0
      %s124 = sadd.s32 %s123, 1
      %s125 = scalar_select %p122, %s123, %s124
      %p128 = pneg %p122
      %p129 = scmp.eq.s32.totalorder %s27, 3
      %p130 = por %p128, %p129
      %p131 = scmp.ne.s32.totalorder %s123, %s126
      %p132 = scmp.eq.s32.totalorder %s27, 0
      %p133 = por %p131, %p132
      %p134 = scmp.ne.s32.totalorder %s123, %s126
      %p135 = scmp.eq.s32.totalorder %s32, 3
      %p136 = por %p134, %p135
      %p137 = scmp.ne.s32.totalorder %s126, %s127
      %p138 = scmp.eq.s32.totalorder %s32, 0
      %p139 = por %p137, %p138
      %p140 = scmp.ne.s32.totalorder %s126, %s127
      %p141 = scmp.eq.s32.totalorder %s33, 3
      %p142 = por %p140, %p141
      %p144 = scmp.ne.s32.totalorder %s127, %s143
      %p145 = scmp.eq.s32.totalorder %s33, 0
      %p146 = por %p144, %p145
      %s148 = sadd.s32 %s147, 1
      %p151 = scmp.eq.s32.totalorder %s27, 3
      %p152 = scmp.ne.s32.totalorder %s147, %s149
      %p153 = scmp.eq.s32.totalorder %s27, 0
      %p154 = por %p152, %p153
      %p155 = scmp.ne.s32.totalorder %s147, %s149
      %p156 = scmp.eq.s32.totalorder %s32, 3
      %p157 = por %p155, %p156
      %p158 = scmp.ne.s32.totalorder %s149, %s150
      %p159 = scmp.eq.s32.totalorder %s32, 0
      %p160 = por %p158, %p159
      %p161 = scmp.ne.s32.totalorder %s149, %s150
      %p162 = scmp.eq.s32.totalorder %s33, 3
      %p163 = por %p161, %p162
      %p165 = scmp.ne.s32.totalorder %s150, %s164
      %p166 = scmp.eq.s32.totalorder %s33, 0
      %p167 = por %p165, %p166
      %s169 = sadd.s32 %s168, 1
      %p172 = scmp.eq.s32.totalorder %s27, 3
      %p173 = scmp.ne.s32.totalorder %s168, %s170
      %p174 = scmp.eq.s32.totalorder %s27, 0
      %p175 = por %p173, %p174
      %p176 = scmp.ne.s32.totalorder %s168, %s170
      %p177 = scmp.eq.s32.totalorder %s32, 3
      %p178 = por %p176, %p177
      %p179 = scmp.ne.s32.totalorder %s170, %s171
      %p180 = scmp.eq.s32.totalorder %s32, 0
      %p181 = por %p179, %p180
      %p182 = scmp.ne.s32.totalorder %s170, %s171
      %p183 = scmp.eq.s32.totalorder %s33, 3
      %p184 = por %p182, %p183
      %p186 = scmp.ne.s32.totalorder %s171, %s185
      %p187 = scmp.eq.s32.totalorder %s33, 0
      %p188 = por %p186, %p187
      %s190 = sadd.s32 %s189, 1
      %p193 = scmp.eq.s32.totalorder %s27, 3
      %p194 = scmp.ne.s32.totalorder %s189, %s191
      %p195 = scmp.eq.s32.totalorder %s27, 0
      %p196 = por %p194, %p195
      %p197 = scmp.ne.s32.totalorder %s189, %s191
      %p198 = scmp.eq.s32.totalorder %s32, 3
      %p199 = por %p197, %p198
      %p200 = scmp.ne.s32.totalorder %s191, %s192
      %p201 = scmp.eq.s32.totalorder %s32, 0
      %p202 = por %p200, %p201
      %p203 = scmp.ne.s32.totalorder %s191, %s192
      %p204 = scmp.eq.s32.totalorder %s33, 3
      %p205 = por %p203, %p204
      %p207 = scmp.ne.s32.totalorder %s192, %s206
      %p208 = scmp.eq.s32.totalorder %s33, 0
      %p209 = por %p207, %p208
      %s211 = sadd.s32 %s210, 1
      %p214 = scmp.eq.s32.totalorder %s27, 3
      %p215 = scmp.ne.s32.totalorder %s210, %s212
      %p216 = scmp.eq.s32.totalorder %s27, 0
      %p217 = por %p215, %p216
      %p218 = scmp.ne.s32.totalorder %s210, %s212
      %p219 = scmp.eq.s32.totalorder %s32, 3
      %p220 = por %p218, %p219
      %p221 = scmp.ne.s32.totalorder %s212, %s213
      %p222 = scmp.eq.s32.totalorder %s32, 0
      %p223 = por %p221, %p222
      %p224 = scmp.ne.s32.totalorder %s212, %s213
      %p225 = scmp.eq.s32.totalorder %s33, 3
      %p226 = por %p224, %p225
      %p228 = scmp.ne.s32.totalorder %s213, %s227
      %p229 = scmp.eq.s32.totalorder %s33, 0
      %p230 = por %p228, %p229
      %s232 = sadd.s32 %s231, 1
      %p235 = scmp.eq.s32.totalorder %s27, 3
      %p236 = scmp.ne.s32.totalorder %s231, %s233
      %p237 = scmp.eq.s32.totalorder %s27, 0
      %p238 = por %p236, %p237
      %p239 = scmp.ne.s32.totalorder %s231, %s233
      %p240 = scmp.eq.s32.totalorder %s32, 3
      %p241 = por %p239, %p240
      %p242 = scmp.ne.s32.totalorder %s233, %s234
      %p243 = scmp.eq.s32.totalorder %s32, 0
      %p244 = por %p242, %p243
      %p245 = scmp.ne.s32.totalorder %s233, %s234
      %p246 = scmp.eq.s32.totalorder %s33, 3
      %p247 = por %p245, %p246
      %p249 = scmp.ne.s32.totalorder %s234, %s248
      %p250 = scmp.eq.s32.totalorder %s33, 0
      %p251 = por %p249, %p250
      %s253 = sadd.s32 %s252, 1
      %p256 = scmp.eq.s32.totalorder %s27, 3
      %p257 = scmp.ne.s32.totalorder %s252, %s254
      %p258 = scmp.eq.s32.totalorder %s27, 0
      %p259 = por %p257, %p258
      %p260 = scmp.ne.s32.totalorder %s252, %s254
      %p261 = scmp.eq.s32.totalorder %s32, 3
      %p262 = por %p260, %p261
      %p263 = scmp.ne.s32.totalorder %s254, %s255
      %p264 = scmp.eq.s32.totalorder %s32, 0
      %p265 = por %p263, %p264
      %p266 = scmp.ne.s32.totalorder %s254, %s255
      %p267 = scmp.eq.s32.totalorder %s33, 3
      %p268 = por %p266, %p267
      %p270 = scmp.ne.s32.totalorder %s255, %s269
      %p271 = scmp.eq.s32.totalorder %s33, 0
      %p272 = por %p270, %p271
      %s274 = sadd.s32 %s273, 1
      %p277 = scmp.eq.s32.totalorder %s27, 3
      %p278 = scmp.ne.s32.totalorder %s273, %s275
      %p279 = scmp.eq.s32.totalorder %s27, 0
      %p280 = por %p278, %p279
      %p281 = scmp.ne.s32.totalorder %s273, %s275
      %p282 = scmp.eq.s32.totalorder %s32, 3
      %p283 = por %p281, %p282
      %p284 = scmp.ne.s32.totalorder %s275, %s276
      %p285 = scmp.eq.s32.totalorder %s32, 0
      %p286 = por %p284, %p285
      %p287 = scmp.ne.s32.totalorder %s275, %s276
      %p288 = scmp.eq.s32.totalorder %s33, 3
      %p289 = por %p287, %p288
      %p291 = scmp.ne.s32.totalorder %s276, %s290
      %p292 = scmp.eq.s32.totalorder %s33, 0
      %p293 = por %p291, %p292
      %s295 = sadd.s32 %s294, 1
      %p298 = scmp.eq.s32.totalorder %s27, 3
      %p299 = scmp.ne.s32.totalorder %s294, %s296
      %p300 = scmp.eq.s32.totalorder %s27, 0
      %p301 = por %p299, %p300
      %p302 = scmp.ne.s32.totalorder %s294, %s296
      %p303 = scmp.eq.s32.totalorder %s32, 3
      %p304 = por %p302, %p303
      %p305 = scmp.ne.s32.totalorder %s296, %s297
      %p306 = scmp.eq.s32.totalorder %s32, 0
      %p307 = por %p305, %p306
      %p308 = scmp.ne.s32.totalorder %s296, %s297
      %p309 = scmp.eq.s32.totalorder %s33, 3
      %p310 = por %p308, %p309
      %p312 = scmp.ne.s32.totalorder %s297, %s311
      %p313 = scmp.eq.s32.totalorder %s33, 0
      %p314 = por %p312, %p313
      %s316 = sadd.s32 %s315, 1
      %p319 = scmp.eq.s32.totalorder %s27, 3
      %p320 = scmp.ne.s32.totalorder %s315, %s317
      %p321 = scmp.eq.s32.totalorder %s27, 0
      %p322 = por %p320, %p321
      %p323 = scmp.ne.s32.totalorder %s315, %s317
      %p324 = scmp.eq.s32.totalorder %s32, 3
      %p325 = por %p323, %p324
      %p326 = scmp.ne.s32.totalorder %s317, %s318
      %p327 = scmp.eq.s32.totalorder %s32, 0
      %p328 = por %p326, %p327
      %p329 = scmp.ne.s32.totalorder %s317, %s318
      %p330 = scmp.eq.s32.totalorder %s33, 3
      %p331 = por %p329, %p330
      %p333 = scmp.ne.s32.totalorder %s318, %s332
      %p334 = scmp.eq.s32.totalorder %s33, 0
      %p335 = por %p333, %p334
      %s336 = ssub.s32 %s34, %s46
      %s337 = ssub.s32 %s35, %s42
      %s338 = sor.u32 %s336, %s337
      %p339 = scmp.eq.s32.totalorder %s338, 0
      %s341 = sadd.s32 %s340, 1
      %s342 = scalar_select %p339, %s340, %s341
      %p345 = pneg %p339
      %p346 = scmp.eq.s32.totalorder %s27, 3
      %p347 = por %p345, %p346
      %p348 = scmp.ne.s32.totalorder %s340, %s343
      %p349 = scmp.eq.s32.totalorder %s27, 0
      %p350 = por %p348, %p349
      %p351 = scmp.ne.s32.totalorder %s340, %s343
      %p352 = scmp.eq.s32.totalorder %s32, 3
      %p353 = por %p351, %p352
      %p354 = scmp.ne.s32.totalorder %s343, %s344
      %p355 = scmp.eq.s32.totalorder %s32, 0
      %p356 = por %p354, %p355
      %p357 = scmp.ne.s32.totalorder %s343, %s344
      %p358 = scmp.eq.s32.totalorder %s33, 3
      %p359 = por %p357, %p358
      %p361 = scmp.ne.s32.totalorder %s344, %s360
      %p362 = scmp.eq.s32.totalorder %s33, 0
      %p363 = por %p361, %p362
      %p364 = scmp.le.s32.totalorder 1, %s27
      %p365 = scmp.lt.s32.totalorder %s27, 5
      %p366 = pnand %p364, %p365
      %p367 = pneg %p366
      // Predicated region
      $region9: #{tpu_custom_call.1} parent=5 // pred_check
        _
      $region10: #{tpu_custom_call.1} parent=5 // pred_check_branch
        %369 = sbr.rel (%p366) target = $region12
      $region11: #{tpu_custom_call.1} parent=5 // pred_region
        %s370 = ssub.s32 %s27, 1
        // Predicated region
        $region13: #{tpu_custom_call.1} parent=11 // pred_check
          %p371 = pneg %p160
        $region14: #{tpu_custom_call.1} parent=11 // pred_check_branch
          %373 = sbr.rel (%p371) target = $region16
        $region15: #{tpu_custom_call.1} parent=11 // pred_region
          _
        $region16: #{tpu_custom_call.1} parent=11 // pred_fallthru
          _
        // Predicated region
        $region17: #{tpu_custom_call.1} parent=11 // pred_check
          %p374 = pneg %p181
        $region18: #{tpu_custom_call.1} parent=11 // pred_check_branch
          %376 = sbr.rel (%p374) target = $region20
        $region19: #{tpu_custom_call.1} parent=11 // pred_region
          _
        $region20: #{tpu_custom_call.1} parent=11 // pred_fallthru
          _
        // Predicated region
        $region21: #{tpu_custom_call.1} parent=11 // pred_check
          %p377 = pneg %p202
        $region22: #{tpu_custom_call.1} parent=11 // pred_check_branch
          %379 = sbr.rel (%p377) target = $region24
        $region23: #{tpu_custom_call.1} parent=11 // pred_region
          _
        $region24: #{tpu_custom_call.1} parent=11 // pred_fallthru
          _
        // Predicated region
        $region25: #{tpu_custom_call.1} parent=11 // pred_check
          %p380 = pneg %p223
        $region26: #{tpu_custom_call.1} parent=11 // pred_check_branch
          %382 = sbr.rel (%p380) target = $region28
        $region27: #{tpu_custom_call.1} parent=11 // pred_region
          _
        $region28: #{tpu_custom_call.1} parent=11 // pred_fallthru
          _
        // Predicated region
        $region29: #{tpu_custom_call.1} parent=11 // pred_check
          %p383 = pneg %p244
        $region30: #{tpu_custom_call.1} parent=11 // pred_check_branch
          %385 = sbr.rel (%p383) target = $region32
        $region31: #{tpu_custom_call.1} parent=11 // pred_region
          _
        $region32: #{tpu_custom_call.1} parent=11 // pred_fallthru
          _
        // Predicated region
        $region33: #{tpu_custom_call.1} parent=11 // pred_check
          %p386 = pneg %p265
        $region34: #{tpu_custom_call.1} parent=11 // pred_check_branch
          %388 = sbr.rel (%p386) target = $region36
        $region35: #{tpu_custom_call.1} parent=11 // pred_region
          _
        $region36: #{tpu_custom_call.1} parent=11 // pred_fallthru
          _
        // Predicated region
        $region37: #{tpu_custom_call.1} parent=11 // pred_check
          %p389 = pneg %p286
        $region38: #{tpu_custom_call.1} parent=11 // pred_check_branch
          %391 = sbr.rel (%p389) target = $region40
        $region39: #{tpu_custom_call.1} parent=11 // pred_region
          _
        $region40: #{tpu_custom_call.1} parent=11 // pred_fallthru
          _
        // Predicated region
        $region41: #{tpu_custom_call.1} parent=11 // pred_check
          %p392 = pneg %p307
        $region42: #{tpu_custom_call.1} parent=11 // pred_check_branch
          %394 = sbr.rel (%p392) target = $region44
        $region43: #{tpu_custom_call.1} parent=11 // pred_region
          _
        $region44: #{tpu_custom_call.1} parent=11 // pred_fallthru
          _
        // Predicated region
        $region45: #{tpu_custom_call.1} parent=11 // pred_check
          %p395 = pneg %p328
        $region46: #{tpu_custom_call.1} parent=11 // pred_check_branch
          %397 = sbr.rel (%p395) target = $region48
        $region47: #{tpu_custom_call.1} parent=11 // pred_region
          _
        $region48: #{tpu_custom_call.1} parent=11 // pred_fallthru
          _
      $region12: #{tpu_custom_call.1} parent=5 // pred_fallthru
        _
      %p398 = scmp.lt.s32.totalorder %s27, 4
      // Predicated region
      $region49: #{tpu_custom_call.1} parent=5 // pred_check
        %p399 = pneg %p398
      $region50: #{tpu_custom_call.1} parent=5 // pred_check_branch
        %401 = sbr.rel (%p399) target = $region52
      $region51: #{tpu_custom_call.1} parent=5 // pred_region
        // Predicated region
        $region53: #{tpu_custom_call.1} parent=51 // pred_check
          %p402 = pneg %p61
        $region54: #{tpu_custom_call.1} parent=51 // pred_check_branch
          %404 = sbr.rel (%p402) target = $region56
        $region55: #{tpu_custom_call.1} parent=51 // pred_region
          %s405 = smul.u32 8, %s35
          %p406 = scmp.lt.s32.totalorder %s34, 1
          %s407 = scalar_select %p406, %s34, 1
          %p408 = scmp.lt.s32.totalorder %s405, 15
          %s409 = scalar_select %p408, %s405, 15
          %s410 = smul.addr %s409, 2
          %s411 = smul.addr %s407, 32
          %s412 = sadd.s32 %s410, %s411
          %s413 = smul.addr %s412, 4
          %s414 = scalar_lea.vmem %s0, %s413
          %s415 = smul.u32 8, %s35
        $region56: #{tpu_custom_call.1} parent=51 // pred_fallthru
          _
        // Predicated region
        $region57: #{tpu_custom_call.1} parent=51 // pred_check
          %p416 = pneg %p97
        $region58: #{tpu_custom_call.1} parent=51 // pred_check_branch
          %418 = sbr.rel (%p416) target = $region60
        $region59: #{tpu_custom_call.1} parent=51 // pred_region
          %s419 = sand.u32 %s87, 1
          %s420 = scalar_lea.sflag [#allocation4], %s419
          %s421 = sand.u32 %s87, 1
          %s422 = smul.addr %s421, 8
          %s423 = scalar_lea.vmem [#allocation3], %s422
          %s424 = smul.u32 %s35, 8
          %s425 = ssub.s32 %s424, 1
          %p426 = scmp.gt.s32.totalorder %s425, 0
          %s427 = scalar_select %p426, %s425, 0
          %s429 = ssub.s32 128, 128
          %430 = vsyncadd %s420, %s429
          %s431 = smul.addr %s427, 2
          %s432 = smul.addr %s34, 32
          %s433 = sadd.s32 %s431, %s432
          %s434 = smul.addr %s433, 64
          %s435 = scalar_lea.hbm %s1, %s434
          %s436 = sshll.u32 %s423, 4
          %s437 = int_to_ptr.vmem [resolvable:$true] %s436
          %442 = dma.hbm_to_vmem [thread:$0]  %s435, 128, %s437, %s420, 64, 64, 4
        $region60: #{tpu_custom_call.1} parent=51 // pred_fallthru
          _
        // Predicated region
        $region61: #{tpu_custom_call.1} parent=51 // pred_check
          %p443 = pneg %p133
        $region62: #{tpu_custom_call.1} parent=51 // pred_check_branch
          %445 = sbr.rel (%p443) target = $region64
        $region63: #{tpu_custom_call.1} parent=51 // pred_region
          %s446 = sand.u32 %s123, 1
          %s447 = scalar_lea.sflag [#allocation7], %s446
          %s448 = sand.u32 %s123, 1
          %s449 = smul.addr %s448, 8
          %s450 = scalar_lea.vmem [#allocation6], %s449
          %s451 = sadd.s32 %s35, 1
          %s452 = smul.u32 %s451, 8
          %p453 = scmp.lt.s32.totalorder %s452, 15
          %s454 = scalar_select %p453, %s452, 15
          %s456 = ssub.s32 128, 128
          %457 = vsyncadd %s447, %s456
          %s458 = smul.addr %s454, 2
          %s459 = smul.addr %s34, 32
          %s460 = sadd.s32 %s458, %s459
          %s461 = smul.addr %s460, 64
          %s462 = scalar_lea.hbm %s2, %s461
          %s463 = sshll.u32 %s450, 4
          %s464 = int_to_ptr.vmem [resolvable:$true] %s463
          %469 = dma.hbm_to_vmem [thread:$0]  %s462, 128, %s464, %s447, 64, 64, 4
        $region64: #{tpu_custom_call.1} parent=51 // pred_fallthru
          _
      $region52: #{tpu_custom_call.1} parent=5 // pred_fallthru
        _
      %p470 = scmp.le.s32.totalorder 1, %s27
      %p471 = scmp.lt.s32.totalorder %s27, 5
      %p472 = pnand %p470, %p471
      %p473 = pneg %p472
      // Predicated region
      $region65: #{tpu_custom_call.1} parent=5 // pred_check
        _
      $region66: #{tpu_custom_call.1} parent=5 // pred_check_branch
        %475 = sbr.rel (%p472) target = $region68
      $region67: #{tpu_custom_call.1} parent=5 // pred_region
        %s476 = ssub.s32 %s27, 1
        %s477 = sand.u32 %s90, 1
        %s478 = scalar_lea.sflag [#allocation4], %s477
        %s479 = sand.u32 %s90, 1
        %s480 = smul.addr %s479, 8
        %s481 = scalar_lea.vmem [#allocation3], %s480
        // Predicated region
        $region69: #{tpu_custom_call.1} parent=67 // pred_check
          %p482 = pneg %p103
        $region70: #{tpu_custom_call.1} parent=67 // pred_check_branch
          %484 = sbr.rel (%p482) target = $region72
        $region71: #{tpu_custom_call.1} parent=67 // pred_region
          %485 = dma.done %s478, 128
        $region72: #{tpu_custom_call.1} parent=67 // pred_fallthru
          _
        %s486 = sand.u32 %s126, 1
        %s487 = scalar_lea.sflag [#allocation7], %s486
        %s488 = sand.u32 %s126, 1
        %s489 = smul.addr %s488, 8
        %s490 = scalar_lea.vmem [#allocation6], %s489
        // Predicated region
        $region73: #{tpu_custom_call.1} parent=67 // pred_check
          %p491 = pneg %p139
        $region74: #{tpu_custom_call.1} parent=67 // pred_check_branch
          %493 = sbr.rel (%p491) target = $region76
        $region75: #{tpu_custom_call.1} parent=67 // pred_region
          %494 = dma.done %s487, 128
        $region76: #{tpu_custom_call.1} parent=67 // pred_fallthru
          _
        %s495 = smul.u32 8, %s37
        %p496 = scmp.lt.s32.totalorder %s36, 1
        %s497 = scalar_select %p496, %s36, 1
        %p498 = scmp.lt.s32.totalorder %s495, 15
        %s499 = scalar_select %p498, %s495, 15
        %s500 = smul.addr %s499, 2
        %s501 = smul.addr %s497, 32
        %s502 = sadd.s32 %s500, %s501
        %s503 = smul.addr %s502, 4
        %s504 = scalar_lea.vmem %s0, %s503
        %p505 = pneg %p67
        %p506 = pneg %p64
        %s507 = sand.u32 %s90, 1
        %s508 = scalar_lea.sflag [#allocation4], %s507
        %s509 = sand.u32 %s90, 1
        %s510 = smul.addr %s509, 8
        %s511 = scalar_lea.vmem [#allocation3], %s510
        %p512 = pneg %p103
        %p513 = pneg %p100
        %s514 = sand.u32 %s126, 1
        %s515 = scalar_lea.sflag [#allocation7], %s514
        %s516 = sand.u32 %s126, 1
        %s517 = smul.addr %s516, 8
        %s518 = scalar_lea.vmem [#allocation6], %s517
        %p519 = pneg %p139
        %p520 = pneg %p136
        %p521 = pneg %p160
        %p522 = pneg %p157
        %p523 = pneg %p181
        %p524 = pneg %p178
        %p525 = pneg %p202
        %p526 = pneg %p199
        %p527 = pneg %p223
        %p528 = pneg %p220
        %p529 = pneg %p244
        %p530 = pneg %p241
        %p531 = pneg %p265
        %p532 = pneg %p262
        %p533 = pneg %p286
        %p534 = pneg %p283
        %p535 = pneg %p307
        %p536 = pneg %p304
        %p537 = pneg %p328
        %p538 = pneg %p325
        %p539 = pneg %p356
        %p540 = pneg %p353
        %s541 = sand.u32 %s343, 1
        %s542 = scalar_lea.sflag [#allocation5], %s541
        %s543 = sand.u32 %s343, 1
        %s544 = smul.addr %s543, 64
        %s545 = scalar_lea.vmem [#allocation8], %s544
        %s546 = smul.u32 8, %s37
        %p547 = scmp.lt.s32.totalorder %s36, 1
        %s548 = scalar_select %p547, %s36, 1
        %p549 = scmp.lt.s32.totalorder %s546, 15
        %s550 = scalar_select %p549, %s546, 15
        %s551 = smul.addr %s550, 2
        %s552 = smul.addr %s548, 32
        %s553 = sadd.s32 %s551, %s552
        %s554 = smul.addr %s553, 4
        %s555 = scalar_lea.vmem %s0, %s554
        %s556 = smul.u32 8, %s37
        %s557 = smul.u32 %s37, 8
        %s558 = ssub.s32 %s557, 1
        %p559 = scmp.gt.s32.totalorder %s558, 0
        %s560 = scalar_select %p559, %s558, 0
        %s561 = sadd.s32 %s37, 1
        %s562 = smul.u32 %s561, 8
        %p563 = scmp.lt.s32.totalorder %s562, 15
        %s564 = scalar_select %p563, %s562, 15
        %s565 = smul.u32 8, %s37
        %v567 = vld [vmem:[%s555] sm:$0xf]
        %v568 = vld [vmem:[%s555 + $0x4] sm:$0xf]
        %v569 = vld [vmem:[%s555 + $0x8] sm:$0xf]
        %v570 = vld [vmem:[%s555 + $0xc] sm:$0xf]
        %v571 = vld [vmem:[%s555 + $0x10] sm:$0xf]
        %v572 = vld [vmem:[%s555 + $0x14] sm:$0xf]
        %v573 = vld [vmem:[%s555 + $0x18] sm:$0xf]
        %v574 = vld [vmem:[%s555 + $0x1c] sm:$0xf]
        %v575 = vld [vmem:[%s555 + $0x20] sm:$0xf]
        %v576 = vld [vmem:[%s555 + $0x24] sm:$0xf]
        %v577 = vld [vmem:[%s555 + $0x28] sm:$0xf]
        %v578 = vld [vmem:[%s555 + $0x2c] sm:$0xf]
        %v579 = vld [vmem:[%s555 + $0x30] sm:$0xf]
        %v580 = vld [vmem:[%s555 + $0x34] sm:$0xf]
        %v581 = vld [vmem:[%s555 + $0x38] sm:$0xf]
        %v582 = vld [vmem:[%s555 + $0x3c] sm:$0xf]
        %v583 = vld [vmem:[%s3] sm:$0xf]
        %v584 = vld [vmem:[%s3 + $0x4] sm:$0xf]
        %v585 = vld [vmem:[%s3 + $0x8] sm:$0xf]
        %v586 = vld [vmem:[%s3 + $0xc] sm:$0xf]
        %v587 = vld [vmem:[%s3 + $0x10] sm:$0xf]
        %v588 = vld [vmem:[%s3 + $0x14] sm:$0xf]
        %v589 = vld [vmem:[%s3 + $0x18] sm:$0xf]
        %v590 = vld [vmem:[%s3 + $0x1c] sm:$0xf]
        %v591 = vld [vmem:[%s3 + $0x20] sm:$0xf]
        %v592 = vld [vmem:[%s3 + $0x24] sm:$0xf]
        %v593 = vld [vmem:[%s3 + $0x28] sm:$0xf]
        %v594 = vld [vmem:[%s3 + $0x2c] sm:$0xf]
        %v595 = vld [vmem:[%s3 + $0x30] sm:$0xf]
        %v596 = vld [vmem:[%s3 + $0x34] sm:$0xf]
        %v597 = vld [vmem:[%s3 + $0x38] sm:$0xf]
        %v598 = vld [vmem:[%s3 + $0x3c] sm:$0xf]
        %v615 = vunpack.c.l.b16 %v567
        %v616 = vunpack.c.l.b16 %v568
        %v617 = vunpack.c.l.b16 %v569
        %v618 = vunpack.c.l.b16 %v570
        %v619 = vunpack.c.l.b16 %v571
        %v620 = vunpack.c.l.b16 %v572
        %v621 = vunpack.c.l.b16 %v573
        %v622 = vunpack.c.l.b16 %v574
        %v623 = vunpack.c.l.b16 %v575
        %v624 = vunpack.c.l.b16 %v576
        %v625 = vunpack.c.l.b16 %v577
        %v626 = vunpack.c.l.b16 %v578
        %v627 = vunpack.c.l.b16 %v579
        %v628 = vunpack.c.l.b16 %v580
        %v629 = vunpack.c.l.b16 %v581
        %v630 = vunpack.c.l.b16 %v582
        %v631 = vpack.c.b16 %v616, %v615
        %v632 = vpack.c.b16 %v618, %v617
        %v633 = vpack.c.b16 %v620, %v619
        %v634 = vpack.c.b16 %v622, %v621
        %v635 = vpack.c.b16 %v624, %v623
        %v636 = vpack.c.b16 %v626, %v625
        %v637 = vpack.c.b16 %v628, %v627
        %v638 = vpack.c.b16 %v630, %v629
        %v663 = vunpack.c.l.b16 %v583
        %v664 = vunpack.c.l.b16 %v584
        %v665 = vunpack.c.l.b16 %v585
        %v666 = vunpack.c.l.b16 %v586
        %v667 = vunpack.c.l.b16 %v587
        %v668 = vunpack.c.l.b16 %v588
        %v669 = vunpack.c.l.b16 %v589
        %v670 = vunpack.c.l.b16 %v590
        %v671 = vunpack.c.l.b16 %v591
        %v672 = vunpack.c.l.b16 %v592
        %v673 = vunpack.c.l.b16 %v593
        %v674 = vunpack.c.l.b16 %v594
        %v675 = vunpack.c.l.b16 %v595
        %v676 = vunpack.c.l.b16 %v596
        %v677 = vunpack.c.l.b16 %v597
        %v678 = vunpack.c.l.b16 %v598
        %v679 = vpack.c.b16 %v664, %v663
        %v680 = vpack.c.b16 %v666, %v665
        %v681 = vpack.c.b16 %v668, %v667
        %v682 = vpack.c.b16 %v670, %v669
        %v683 = vpack.c.b16 %v672, %v671
        %v684 = vpack.c.b16 %v674, %v673
        %v685 = vpack.c.b16 %v676, %v675
        %v686 = vpack.c.b16 %v678, %v677
        %695 = vmatprep.subr.bf16.mxu0 0
        %696 = vmatpush1.bf16.msra.mxu0 %v686
        %697 = vmatprep.subr.bf16.mxu0 0
        %698 = vmatpush1.bf16.msra.mxu0 %v685
        %699 = vmatprep.subr.bf16.mxu0 0
        %700 = vmatpush1.bf16.msra.mxu0 %v684
        %701 = vmatprep.subr.bf16.mxu0 0
        %702 = vmatpush1.bf16.msra.mxu0 %v683
        %703 = vmatprep.subr.bf16.mxu0 0
        %704 = vmatpush1.bf16.msra.mxu0 %v682
        %705 = vmatprep.subr.bf16.mxu0 0
        %706 = vmatpush1.bf16.msra.mxu0 %v681
        %707 = vmatprep.subr.bf16.mxu0 0
        %708 = vmatpush1.bf16.msra.mxu0 %v680
        %709 = vmatprep.subr.bf16.mxu0 0
        %710 = vmatpush1.bf16.msra.mxu0 %v679
        %711 = vmatprep.subr.bf16.mxu0 0
        %712 = vmatpush2.bf16.msra.mxu0 0
        %713 = vmatprep.subr.bf16.mxu0 0
        %714 = vmatpush2.bf16.msra.mxu0 0
        %715 = vmatprep.subr.bf16.mxu0 0
        %716 = vmatpush2.bf16.msra.mxu0 0
        %717 = vmatprep.subr.bf16.mxu0 0
        %718 = vmatpush2.bf16.msra.mxu0 0
        %719 = vmatprep.subr.bf16.mxu0 0
        %720 = vmatpush2.bf16.msra.mxu0 0
        %721 = vmatprep.subr.bf16.mxu0 0
        %722 = vmatpush2.bf16.msra.mxu0 0
        %723 = vmatprep.subr.bf16.mxu0 0
        %724 = vmatpush2.bf16.msra.mxu0 0
        %725 = vmatprep.subr.bf16.mxu0 0
        %726 = vmatpush2.bf16.msra.mxu0 0
        %727 = vmatprep.mubr.bf16.mxu0 0
        %728 = vmatmul.mubr.bf16.gmra.mxu0 %v631
        %v729 = vpop.f32.mrf.mxu0
        %v730 = vadd.f32 0.0, %v729
        %v731 = vpop.f32.mrf.mxu0
        %v732 = vpop.f32.mrf.mxu0
        %v733 = vadd.f32 0.0, %v732
        %v734 = vpop.f32.mrf.mxu0
        %735 = vmatprep.mubr.bf16.mxu0 0
        %736 = vmatmul.mubr.bf16.gmra.mxu0 %v632
        %v737 = vpop.f32.mrf.mxu0
        %v738 = vadd.f32 0.0, %v737
        %v739 = vpop.f32.mrf.mxu0
        %v740 = vpop.f32.mrf.mxu0
        %v741 = vadd.f32 0.0, %v740
        %v742 = vpop.f32.mrf.mxu0
        %743 = vmatprep.mubr.bf16.mxu0 0
        %744 = vmatmul.mubr.bf16.gmra.mxu0 %v633
        %v745 = vpop.f32.mrf.mxu0
        %v746 = vadd.f32 0.0, %v745
        %v747 = vpop.f32.mrf.mxu0
        %v748 = vpop.f32.mrf.mxu0
        %v749 = vadd.f32 0.0, %v748
        %v750 = vpop.f32.mrf.mxu0
        %751 = vmatprep.mubr.bf16.mxu0 0
        %752 = vmatmul.mubr.bf16.gmra.mxu0 %v634
        %v753 = vpop.f32.mrf.mxu0
        %v754 = vadd.f32 0.0, %v753
        %v755 = vpop.f32.mrf.mxu0
        %v756 = vpop.f32.mrf.mxu0
        %v757 = vadd.f32 0.0, %v756
        %v758 = vpop.f32.mrf.mxu0
        %759 = vmatprep.mubr.bf16.mxu0 0
        %760 = vmatmul.mubr.bf16.gmra.mxu0 %v635
        %v761 = vpop.f32.mrf.mxu0
        %v762 = vadd.f32 0.0, %v761
        %v763 = vpop.f32.mrf.mxu0
        %v764 = vpop.f32.mrf.mxu0
        %v765 = vadd.f32 0.0, %v764
        %v766 = vpop.f32.mrf.mxu0
        %767 = vmatprep.mubr.bf16.mxu0 0
        %768 = vmatmul.mubr.bf16.gmra.mxu0 %v636
        %v769 = vpop.f32.mrf.mxu0
        %v770 = vadd.f32 0.0, %v769
        %v771 = vpop.f32.mrf.mxu0
        %v772 = vpop.f32.mrf.mxu0
        %v773 = vadd.f32 0.0, %v772
        %v774 = vpop.f32.mrf.mxu0
        %775 = vmatprep.mubr.bf16.mxu0 0
        %776 = vmatmul.mubr.bf16.gmra.mxu0 %v637
        %v777 = vpop.f32.mrf.mxu0
        %v778 = vadd.f32 0.0, %v777
        %v779 = vpop.f32.mrf.mxu0
        %v780 = vpop.f32.mrf.mxu0
        %v781 = vadd.f32 0.0, %v780
        %v782 = vpop.f32.mrf.mxu0
        %783 = vmatprep.mubr.bf16.mxu0 0
        %784 = vmatmul.mubr.bf16.gmra.mxu0 %v638
        %v785 = vpop.f32.mrf.mxu0
        %v786 = vadd.f32 0.0, %v785
        %v787 = vpop.f32.mrf.mxu0
        %v788 = vpop.f32.mrf.mxu0
        %v789 = vadd.f32 0.0, %v788
        %v790 = vpop.f32.mrf.mxu0
        %791 = vdwg.mxu0
        %v792 = vld [vmem:[%s4] sm:$0x1]
        %v794 = vlaneseq
        %v795 = vshrl.u32 %v794, 7
        %v796 = vsub.s32 0, %v795
        %v797 = vrot.slane %v792, %v796
        %v799 = vmul.f32 %v730, %v797
        %v800 = vmul.f32 %v733, %v797
        %v801 = vmul.f32 %v738, %v797
        %v802 = vmul.f32 %v741, %v797
        %v803 = vmul.f32 %v746, %v797
        %v804 = vmul.f32 %v749, %v797
        %v805 = vmul.f32 %v754, %v797
        %v806 = vmul.f32 %v757, %v797
        %v807 = vmul.f32 %v762, %v797
        %v808 = vmul.f32 %v765, %v797
        %v809 = vmul.f32 %v770, %v797
        %v810 = vmul.f32 %v773, %v797
        %v811 = vmul.f32 %v778, %v797
        %v812 = vmul.f32 %v781, %v797
        %v813 = vmul.f32 %v786, %v797
        %v814 = vmul.f32 %v789, %v797
        %v815 = vld [vmem:[%s5] sm:$0x1]
        %v817 = vlaneseq
        %v818 = vshrl.u32 %v817, 7
        %v819 = vsub.s32 0, %v818
        %v820 = vrot.slane %v815, %v819
        %v822 = vadd.f32 %v799, %v820
        %v823 = vadd.f32 %v800, %v820
        %v824 = vadd.f32 %v801, %v820
        %v825 = vadd.f32 %v802, %v820
        %v826 = vadd.f32 %v803, %v820
        %v827 = vadd.f32 %v804, %v820
        %v828 = vadd.f32 %v805, %v820
        %v829 = vadd.f32 %v806, %v820
        %v830 = vadd.f32 %v807, %v820
        %v831 = vadd.f32 %v808, %v820
        %v832 = vadd.f32 %v809, %v820
        %v833 = vadd.f32 %v810, %v820
        %v834 = vadd.f32 %v811, %v820
        %v835 = vadd.f32 %v812, %v820
        %v836 = vadd.f32 %v813, %v820
        %v837 = vadd.f32 %v814, %v820
        %v838 = vmax.f32 %v822, 0.0
        %v839 = vmax.f32 %v823, 0.0
        %v840 = vmax.f32 %v824, 0.0
        %v841 = vmax.f32 %v825, 0.0
        %v842 = vmax.f32 %v826, 0.0
        %v843 = vmax.f32 %v827, 0.0
        %v844 = vmax.f32 %v828, 0.0
        %v845 = vmax.f32 %v829, 0.0
        %v846 = vmax.f32 %v830, 0.0
        %v847 = vmax.f32 %v831, 0.0
        %v848 = vmax.f32 %v832, 0.0
        %v849 = vmax.f32 %v833, 0.0
        %v850 = vmax.f32 %v834, 0.0
        %v851 = vmax.f32 %v835, 0.0
        %v852 = vmax.f32 %v836, 0.0
        %v853 = vmax.f32 %v837, 0.0
        %v854 = vpack.c.bf16 %v839, %v838
        %v855 = vpack.c.bf16 %v841, %v840
        %v856 = vpack.c.bf16 %v843, %v842
        %v857 = vpack.c.bf16 %v845, %v844
        %v858 = vpack.c.bf16 %v847, %v846
        %v859 = vpack.c.bf16 %v849, %v848
        %v860 = vpack.c.bf16 %v851, %v850
        %v861 = vpack.c.bf16 %v853, %v852
        %v870 = vunpack.c.l.b16 %v854
        %v871 = vunpack.c.h.b16 %v854
        %v872 = vunpack.c.l.b16 %v855
        %v873 = vunpack.c.h.b16 %v855
        %v874 = vunpack.c.l.b16 %v856
        %v875 = vunpack.c.h.b16 %v856
        %v876 = vunpack.c.l.b16 %v857
        %v877 = vunpack.c.h.b16 %v857
        %v878 = vunpack.c.l.b16 %v858
        %v879 = vunpack.c.h.b16 %v858
        %v880 = vunpack.c.l.b16 %v859
        %v881 = vunpack.c.h.b16 %v859
        %v882 = vunpack.c.l.b16 %v860
        %v883 = vunpack.c.h.b16 %v860
        %v884 = vunpack.c.l.b16 %v861
        %v885 = vunpack.c.h.b16 %v861
        %v886 = vpack.c.b16 %v870, %v870
        %v887 = vpack.c.b16 %v871, %v871
        %v888 = vpack.c.b16 %v872, %v872
        %v889 = vpack.c.b16 %v873, %v873
        %v890 = vpack.c.b16 %v874, %v874
        %v891 = vpack.c.b16 %v875, %v875
        %v892 = vpack.c.b16 %v876, %v876
        %v893 = vpack.c.b16 %v877, %v877
        %v894 = vpack.c.b16 %v878, %v878
        %v895 = vpack.c.b16 %v879, %v879
        %v896 = vpack.c.b16 %v880, %v880
        %v897 = vpack.c.b16 %v881, %v881
        %v898 = vpack.c.b16 %v882, %v882
        %v899 = vpack.c.b16 %v883, %v883
        %v900 = vpack.c.b16 %v884, %v884
        %v901 = vpack.c.b16 %v885, %v885
        %s918 = scalar_lea.vmem [#allocation2], 8
        %vm919 = vcmask 257024
        %920 = vst.msk [vmem:[%s918] sm:$0xf] %vm919, %v886
        %921 = vst.msk [vmem:[%s918 + $0x4] sm:$0xf] %vm919, %v887
        %922 = vst.msk [vmem:[%s918 + $0x8] sm:$0xf] %vm919, %v888
        %923 = vst.msk [vmem:[%s918 + $0xc] sm:$0xf] %vm919, %v889
        %924 = vst.msk [vmem:[%s918 + $0x10] sm:$0xf] %vm919, %v890
        %925 = vst.msk [vmem:[%s918 + $0x14] sm:$0xf] %vm919, %v891
        %926 = vst.msk [vmem:[%s918 + $0x18] sm:$0xf] %vm919, %v892
        %927 = vst.msk [vmem:[%s918 + $0x1c] sm:$0xf] %vm919, %v893
        %928 = vst.msk [vmem:[%s918 + $0x20] sm:$0xf] %vm919, %v894
        %929 = vst.msk [vmem:[%s918 + $0x24] sm:$0xf] %vm919, %v895
        %930 = vst.msk [vmem:[%s918 + $0x28] sm:$0xf] %vm919, %v896
        %931 = vst.msk [vmem:[%s918 + $0x2c] sm:$0xf] %vm919, %v897
        %932 = vst.msk [vmem:[%s918 + $0x30] sm:$0xf] %vm919, %v898
        %933 = vst.msk [vmem:[%s918 + $0x34] sm:$0xf] %vm919, %v899
        %934 = vst.msk [vmem:[%s918 + $0x38] sm:$0xf] %vm919, %v900
        %935 = vst.msk [vmem:[%s918 + $0x3c] sm:$0xf] %vm919, %v901
        %v936 = vld [vmem:[%s481] sm:$0xf]
        %v937 = vld [vmem:[%s481 + $0x4] sm:$0xf]
        %v938 = vld [vmem:[%s490] sm:$0xf]
        %v939 = vld [vmem:[%s490 + $0x4] sm:$0xf]
        %v942 = vunpack.c.l.b16 %v936
        %v943 = vunpack.c.l.b16 %v937
        %v944 = vpack.c.b16 %v943, %v942
        %v948 = vunpack.c.l.b16 %v938
        %v949 = vunpack.c.l.b16 %v939
        %v950 = vpack.c.b16 %v949, %v948
        %v952 = vld [vmem:[%s3] sm:$0xf]
        %v953 = vld [vmem:[%s3 + $0x4] sm:$0xf]
        %v954 = vld [vmem:[%s3 + $0x8] sm:$0xf]
        %v955 = vld [vmem:[%s3 + $0xc] sm:$0xf]
        %v956 = vld [vmem:[%s3 + $0x10] sm:$0xf]
        %v957 = vld [vmem:[%s3 + $0x14] sm:$0xf]
        %v958 = vld [vmem:[%s3 + $0x18] sm:$0xf]
        %v959 = vld [vmem:[%s3 + $0x1c] sm:$0xf]
        %v960 = vld [vmem:[%s3 + $0x20] sm:$0xf]
        %v961 = vld [vmem:[%s3 + $0x24] sm:$0xf]
        %v962 = vld [vmem:[%s3 + $0x28] sm:$0xf]
        %v963 = vld [vmem:[%s3 + $0x2c] sm:$0xf]
        %v964 = vld [vmem:[%s3 + $0x30] sm:$0xf]
        %v965 = vld [vmem:[%s3 + $0x34] sm:$0xf]
        %v966 = vld [vmem:[%s3 + $0x38] sm:$0xf]
        %v967 = vld [vmem:[%s3 + $0x3c] sm:$0xf]
        %v984 = vunpack.c.l.b16 %v952
        %v985 = vunpack.c.l.b16 %v953
        %v986 = vunpack.c.l.b16 %v954
        %v987 = vunpack.c.l.b16 %v955
        %v988 = vunpack.c.l.b16 %v956
        %v989 = vunpack.c.l.b16 %v957
        %v990 = vunpack.c.l.b16 %v958
        %v991 = vunpack.c.l.b16 %v959
        %v992 = vunpack.c.l.b16 %v960
        %v993 = vunpack.c.l.b16 %v961
        %v994 = vunpack.c.l.b16 %v962
        %v995 = vunpack.c.l.b16 %v963
        %v996 = vunpack.c.l.b16 %v964
        %v997 = vunpack.c.l.b16 %v965
        %v998 = vunpack.c.l.b16 %v966
        %v999 = vunpack.c.l.b16 %v967
        %v1000 = vpack.c.b16 %v985, %v984
        %v1001 = vpack.c.b16 %v987, %v986
        %v1002 = vpack.c.b16 %v989, %v988
        %v1003 = vpack.c.b16 %v991, %v990
        %v1004 = vpack.c.b16 %v993, %v992
        %v1005 = vpack.c.b16 %v995, %v994
        %v1006 = vpack.c.b16 %v997, %v996
        %v1007 = vpack.c.b16 %v999, %v998
        %1016 = vmatprep.subr.bf16.mxu0 0
        %1017 = vmatpush1.bf16.msra.mxu0 %v1007
        %1018 = vmatprep.subr.bf16.mxu0 0
        %1019 = vmatpush1.bf16.msra.mxu0 %v1006
        %1020 = vmatprep.subr.bf16.mxu0 0
        %1021 = vmatpush1.bf16.msra.mxu0 %v1005
        %1022 = vmatprep.subr.bf16.mxu0 0
        %1023 = vmatpush1.bf16.msra.mxu0 %v1004
        %1024 = vmatprep.subr.bf16.mxu0 0
        %1025 = vmatpush1.bf16.msra.mxu0 %v1003
        %1026 = vmatprep.subr.bf16.mxu0 0
        %1027 = vmatpush1.bf16.msra.mxu0 %v1002
        %1028 = vmatprep.subr.bf16.mxu0 0
        %1029 = vmatpush1.bf16.msra.mxu0 %v1001
        %1030 = vmatprep.subr.bf16.mxu0 0
        %1031 = vmatpush1.bf16.msra.mxu0 %v1000
        %1032 = vmatprep.subr.bf16.mxu0 0
        %1033 = vmatpush2.bf16.msra.mxu0 0
        %1034 = vmatprep.subr.bf16.mxu0 0
        %1035 = vmatpush2.bf16.msra.mxu0 0
        %1036 = vmatprep.subr.bf16.mxu0 0
        %1037 = vmatpush2.bf16.msra.mxu0 0
        %1038 = vmatprep.subr.bf16.mxu0 0
        %1039 = vmatpush2.bf16.msra.mxu0 0
        %1040 = vmatprep.subr.bf16.mxu0 0
        %1041 = vmatpush2.bf16.msra.mxu0 0
        %1042 = vmatprep.subr.bf16.mxu0 0
        %1043 = vmatpush2.bf16.msra.mxu0 0
        %1044 = vmatprep.subr.bf16.mxu0 0
        %1045 = vmatpush2.bf16.msra.mxu0 0
        %1046 = vmatprep.subr.bf16.mxu0 0
        %1047 = vmatpush2.bf16.msra.mxu0 0
        %1048 = vmatprep.mubr.bf16.mxu0 0
        %1049 = vmatmul.mubr.bf16.gmra.mxu0 %v944
        %v1050 = vpop.f32.mrf.mxu0
        %v1051 = vadd.f32 0.0, %v1050
        %v1052 = vpop.f32.mrf.mxu0
        %v1053 = vpop.f32.mrf.mxu0
        %v1054 = vadd.f32 0.0, %v1053
        %v1055 = vpop.f32.mrf.mxu0
        %1056 = vmatprep.mubr.bf16.mxu0 0
        %1057 = vmatmul.mubr.bf16.gmra.mxu0 %v950
        %v1058 = vpop.f32.mrf.mxu0
        %v1059 = vadd.f32 0.0, %v1058
        %v1060 = vpop.f32.mrf.mxu0
        %v1061 = vpop.f32.mrf.mxu0
        %v1062 = vadd.f32 0.0, %v1061
        %v1063 = vpop.f32.mrf.mxu0
        %1064 = vdwg.mxu0
        %v1065 = vld [vmem:[%s4] sm:$0x1]
        %v1067 = vlaneseq
        %v1068 = vshrl.u32 %v1067, 7
        %v1069 = vsub.s32 0, %v1068
        %v1070 = vrot.slane %v1065, %v1069
        %v1072 = vmul.f32 %v1051, %v1070
        %v1073 = vmul.f32 %v1054, %v1070
        %v1074 = vmul.f32 %v1059, %v1070
        %v1075 = vmul.f32 %v1062, %v1070
        %v1076 = vld [vmem:[%s5] sm:$0x1]
        %v1078 = vlaneseq
        %v1079 = vshrl.u32 %v1078, 7
        %v1080 = vsub.s32 0, %v1079
        %v1081 = vrot.slane %v1076, %v1080
        %v1083 = vadd.f32 %v1072, %v1081
        %v1084 = vadd.f32 %v1073, %v1081
        %v1085 = vadd.f32 %v1074, %v1081
        %v1086 = vadd.f32 %v1075, %v1081
        %v1087 = vmax.f32 %v1083, 0.0
        %v1088 = vmax.f32 %v1084, 0.0
        %v1089 = vmax.f32 %v1085, 0.0
        %v1090 = vmax.f32 %v1086, 0.0
        %p1091 = scmp.gt.s32.totalorder %s37, 0
        %s1092 = scalar_select %p1091, 1, 0
        %s1093 = scvt.s32.f32 %s1092
        %v1094 = vstv %s1093
        %v1095 = vmul.f32 %v1087, %v1094
        %v1096 = vmul.f32 %v1088, %v1094
        %v1097 = vpack.c.bf16 %v1096, %v1095
        %v1099 = vunpack.c.l.b16 %v1097
        %v1100 = vunpack.c.h.b16 %v1097
        %v1101 = vpack.c.b16 %v1099, %v1099
        %v1102 = vpack.c.b16 %v1100, %v1100
        %1105 = vst.msk [vmem:[#allocation2] sm:$0xf] %vm919, %v1101
        %1106 = vst.msk [vmem:[#allocation2 + $0x4] sm:$0xf] %vm919, %v1102
        %p1107 = scmp.lt.s32.totalorder %s37, 1
        %s1108 = scalar_select %p1107, 1, 0
        %s1109 = scvt.s32.f32 %s1108
        %v1110 = vstv %s1109
        %v1111 = vmul.f32 %v1089, %v1110
        %v1112 = vmul.f32 %v1090, %v1110
        %v1113 = vpack.c.bf16 %v1112, %v1111
        %v1115 = vunpack.c.l.b16 %v1113
        %v1116 = vunpack.c.h.b16 %v1113
        %v1117 = vpack.c.b16 %v1115, %v1115
        %v1118 = vpack.c.b16 %v1116, %v1116
        %s1121 = scalar_lea.vmem [#allocation2], 72
        %1122 = vst.msk [vmem:[%s1121] sm:$0xf] %vm919, %v1117
        %1123 = vst.msk [vmem:[%s1121 + $0x4] sm:$0xf] %vm919, %v1118
        %v1124 = vld [vmem:[#allocation2] sm:$0xf]
        %v1125 = vld [vmem:[#allocation2 + $0x4] sm:$0xf]
        %v1126 = vld [vmem:[#allocation2 + $0x8] sm:$0xf]
        %v1127 = vld [vmem:[#allocation2 + $0xc] sm:$0xf]
        %v1128 = vld [vmem:[#allocation2 + $0x10] sm:$0xf]
        %v1129 = vld [vmem:[#allocation2 + $0x14] sm:$0xf]
        %v1130 = vld [vmem:[#allocation2 + $0x18] sm:$0xf]
        %v1131 = vld [vmem:[#allocation2 + $0x1c] sm:$0xf]
        %v1132 = vld [vmem:[#allocation2 + $0x20] sm:$0xf]
        %v1133 = vld [vmem:[#allocation2 + $0x24] sm:$0xf]
        %v1134 = vld [vmem:[#allocation2 + $0x28] sm:$0xf]
        %v1135 = vld [vmem:[#allocation2 + $0x2c] sm:$0xf]
        %v1136 = vld [vmem:[#allocation2 + $0x30] sm:$0xf]
        %v1137 = vld [vmem:[#allocation2 + $0x34] sm:$0xf]
        %v1138 = vld [vmem:[#allocation2 + $0x38] sm:$0xf]
        %v1139 = vld [vmem:[#allocation2 + $0x3c] sm:$0xf]
        %v1140 = vld [vmem:[#allocation2 + $0x40] sm:$0xf]
        %v1141 = vld [vmem:[#allocation2 + $0x44] sm:$0xf]
        %v1142 = vld [vmem:[#allocation2 + $0x48] sm:$0xf]
        %v1143 = vld [vmem:[#allocation2 + $0x4c] sm:$0xf]
        %v1164 = vunpack.c.l.b16 %v1124
        %v1165 = vunpack.c.l.b16 %v1125
        %v1166 = vunpack.c.l.b16 %v1126
        %v1167 = vunpack.c.l.b16 %v1127
        %v1168 = vunpack.c.l.b16 %v1128
        %v1169 = vunpack.c.l.b16 %v1129
        %v1170 = vunpack.c.l.b16 %v1130
        %v1171 = vunpack.c.l.b16 %v1131
        %v1172 = vunpack.c.l.b16 %v1132
        %v1173 = vunpack.c.l.b16 %v1133
        %v1174 = vunpack.c.l.b16 %v1134
        %v1175 = vunpack.c.l.b16 %v1135
        %v1176 = vunpack.c.l.b16 %v1136
        %v1177 = vunpack.c.l.b16 %v1137
        %v1178 = vunpack.c.l.b16 %v1138
        %v1179 = vunpack.c.l.b16 %v1139
        %v1180 = vunpack.c.l.b16 %v1140
        %v1181 = vunpack.c.l.b16 %v1141
        %v1182 = vunpack.c.l.b16 %v1142
        %v1183 = vunpack.c.l.b16 %v1143
        %v1184 = vpack.c.b16 %v1165, %v1164
        %v1185 = vpack.c.b16 %v1167, %v1166
        %v1186 = vpack.c.b16 %v1169, %v1168
        %v1187 = vpack.c.b16 %v1171, %v1170
        %v1188 = vpack.c.b16 %v1173, %v1172
        %v1189 = vpack.c.b16 %v1175, %v1174
        %v1190 = vpack.c.b16 %v1177, %v1176
        %v1191 = vpack.c.b16 %v1179, %v1178
        %v1192 = vpack.c.b16 %v1181, %v1180
        %v1193 = vpack.c.b16 %v1183, %v1182
        %v1195 = vshrl.u32 %v1184, 16
        %v1197 = vrot.slane %v1195, 7
        %v1198 = vshll.u32 %v1184, 16
        %v1200 = vor.u32 %v1197, %v1198
        %v1202 = vshrl.u32 %v1185, 16
        %v1204 = vrot.slane %v1202, 7
        %v1205 = vshll.u32 %v1185, 16
        %v1207 = vor.u32 %v1204, %v1205
        %v1209 = vshrl.u32 %v1186, 16
        %v1211 = vrot.slane %v1209, 7
        %v1212 = vshll.u32 %v1186, 16
        %v1214 = vor.u32 %v1211, %v1212
        %v1216 = vshrl.u32 %v1187, 16
        %v1218 = vrot.slane %v1216, 7
        %v1219 = vshll.u32 %v1187, 16
        %v1221 = vor.u32 %v1218, %v1219
        %v1223 = vshrl.u32 %v1188, 16
        %v1225 = vrot.slane %v1223, 7
        %v1226 = vshll.u32 %v1188, 16
        %v1228 = vor.u32 %v1225, %v1226
        %v1230 = vshrl.u32 %v1189, 16
        %v1232 = vrot.slane %v1230, 7
        %v1233 = vshll.u32 %v1189, 16
        %v1235 = vor.u32 %v1232, %v1233
        %v1237 = vshrl.u32 %v1190, 16
        %v1239 = vrot.slane %v1237, 7
        %v1240 = vshll.u32 %v1190, 16
        %v1242 = vor.u32 %v1239, %v1240
        %v1244 = vshrl.u32 %v1191, 16
        %v1246 = vrot.slane %v1244, 7
        %v1247 = vshll.u32 %v1191, 16
        %v1249 = vor.u32 %v1246, %v1247
        %v1251 = vshrl.u32 %v1192, 16
        %v1253 = vrot.slane %v1251, 7
        %v1254 = vshll.u32 %v1192, 16
        %v1256 = vor.u32 %v1253, %v1254
        %v1258 = vshrl.u32 %v1193, 16
        %v1260 = vrot.slane %v1258, 7
        %v1261 = vshll.u32 %v1193, 16
        %v1263 = vor.u32 %v1260, %v1261
        %vm1274 = vcmask 1040384
        %vm1275 = vsmask.f32 256
        %vm1276 = vmand %vm1274, %vm1275
        %v1277 = vsel %vm1276, 0, %v1200
        %v1278 = vsel %vm1276, 0, %v1207
        %v1279 = vsel %vm1276, 0, %v1214
        %v1280 = vsel %vm1276, 0, %v1221
        %v1281 = vsel %vm1276, 0, %v1228
        %v1282 = vsel %vm1276, 0, %v1235
        %v1283 = vsel %vm1276, 0, %v1242
        %v1284 = vsel %vm1276, 0, %v1249
        %v1285 = vsel %vm1276, 0, %v1256
        %v1286 = vsel %vm1276, 0, %v1263
        %v1287 = vrot.slane %v1198, 1
        %v1288 = vor.u32 %v1195, %v1287
        %v1289 = vrot.slane %v1205, 1
        %v1290 = vor.u32 %v1202, %v1289
        %v1291 = vrot.slane %v1212, 1
        %v1292 = vor.u32 %v1209, %v1291
        %v1293 = vrot.slane %v1219, 1
        %v1294 = vor.u32 %v1216, %v1293
        %v1295 = vrot.slane %v1226, 1
        %v1296 = vor.u32 %v1223, %v1295
        %v1297 = vrot.slane %v1233, 1
        %v1298 = vor.u32 %v1230, %v1297
        %v1299 = vrot.slane %v1240, 1
        %v1300 = vor.u32 %v1237, %v1299
        %v1301 = vrot.slane %v1247, 1
        %v1302 = vor.u32 %v1244, %v1301
        %v1303 = vrot.slane %v1254, 1
        %v1304 = vor.u32 %v1251, %v1303
        %v1305 = vrot.slane %v1261, 1
        %v1306 = vor.u32 %v1258, %v1305
        %vm1317 = vcmask 1047552
        %vm1318 = vsmask.f32 7424
        %vm1319 = vmand %vm1317, %vm1318
        %v1320 = vsel %vm1319, %v1288, 0
        %v1321 = vsel %vm1319, %v1290, 0
        %v1322 = vsel %vm1319, %v1292, 0
        %v1323 = vsel %vm1319, %v1294, 0
        %v1324 = vsel %vm1319, %v1296, 0
        %v1325 = vsel %vm1319, %v1298, 0
        %v1326 = vsel %vm1319, %v1300, 0
        %v1327 = vsel %vm1319, %v1302, 0
        %v1328 = vsel %vm1319, %v1304, 0
        %v1329 = vsel %vm1319, %v1306, 0
        %1330 = vrot.lane.b32.xlu0 %v1184, 32
        %v1331 = vpop.permute.xlu0 %1330
        %1332 = vrot.lane.b32.xlu0 %v1185, 32
        %v1333 = vpop.permute.xlu0 %1332
        %1334 = vrot.lane.b32.xlu0 %v1186, 32
        %v1335 = vpop.permute.xlu0 %1334
        %1336 = vrot.lane.b32.xlu0 %v1187, 32
        %v1337 = vpop.permute.xlu0 %1336
        %1338 = vrot.lane.b32.xlu0 %v1188, 32
        %v1339 = vpop.permute.xlu0 %1338
        %1340 = vrot.lane.b32.xlu0 %v1189, 32
        %v1341 = vpop.permute.xlu0 %1340
        %1342 = vrot.lane.b32.xlu0 %v1190, 32
        %v1343 = vpop.permute.xlu0 %1342
        %1344 = vrot.lane.b32.xlu0 %v1191, 32
        %v1345 = vpop.permute.xlu0 %1344
        %1346 = vrot.lane.b32.xlu0 %v1192, 32
        %v1347 = vpop.permute.xlu0 %1346
        %1348 = vrot.lane.b32.xlu0 %v1193, 32
        %v1349 = vpop.permute.xlu0 %1348
        %1360 = vrot.lane.b32.xlu0 %v1320, 64
        %v1361 = vpop.permute.xlu0 %1360
        %1362 = vrot.lane.b32.xlu0 %v1321, 64
        %v1363 = vpop.permute.xlu0 %1362
        %1364 = vrot.lane.b32.xlu0 %v1322, 64
        %v1365 = vpop.permute.xlu0 %1364
        %1366 = vrot.lane.b32.xlu0 %v1323, 64
        %v1367 = vpop.permute.xlu0 %1366
        %1368 = vrot.lane.b32.xlu0 %v1324, 64
        %v1369 = vpop.permute.xlu0 %1368
        %1370 = vrot.lane.b32.xlu0 %v1325, 64
        %v1371 = vpop.permute.xlu0 %1370
        %1372 = vrot.lane.b32.xlu0 %v1326, 64
        %v1373 = vpop.permute.xlu0 %1372
        %1374 = vrot.lane.b32.xlu0 %v1327, 64
        %v1375 = vpop.permute.xlu0 %1374
        %1376 = vrot.lane.b32.xlu0 %v1328, 64
        %v1377 = vpop.permute.xlu0 %1376
        %1378 = vrot.lane.b32.xlu0 %v1329, 64
        %v1379 = vpop.permute.xlu0 %1378
        %vm1380 = vcmask 261120
        %v1383 = vsel %vm1380, %v1277, %v1331
        %v1386 = vsel %vm1380, %v1278, %v1333
        %v1389 = vsel %vm1380, %v1279, %v1335
        %v1392 = vsel %vm1380, %v1280, %v1337
        %v1395 = vsel %vm1380, %v1281, %v1339
        %v1398 = vsel %vm1380, %v1282, %v1341
        %v1401 = vsel %vm1380, %v1283, %v1343
        %v1404 = vsel %vm1380, %v1284, %v1345
        %v1407 = vsel %vm1380, %v1285, %v1347
        %v1410 = vsel %vm1380, %v1286, %v1349
        %vm1411 = vcmask 523264
        %v1413 = vsel %vm1411, %v1383, %v1361
        %v1415 = vsel %vm1411, %v1386, %v1363
        %v1417 = vsel %vm1411, %v1389, %v1365
        %v1419 = vsel %vm1411, %v1392, %v1367
        %v1421 = vsel %vm1411, %v1395, %v1369
        %v1423 = vsel %vm1411, %v1398, %v1371
        %v1425 = vsel %vm1411, %v1401, %v1373
        %v1427 = vsel %vm1411, %v1404, %v1375
        %v1429 = vsel %vm1411, %v1407, %v1377
        %v1431 = vsel %vm1411, %v1410, %v1379
        %v1432 = vld [vmem:[%s6] sm:$0xf]
        %v1433 = vld [vmem:[%s6 + $0x4] sm:$0xf]
        %v1434 = vld [vmem:[%s6 + $0x8] sm:$0xf]
        %v1435 = vld [vmem:[%s6 + $0xc] sm:$0xf]
        %v1436 = vld [vmem:[%s6 + $0x10] sm:$0xf]
        %v1437 = vld [vmem:[%s6 + $0x14] sm:$0xf]
        %v1438 = vld [vmem:[%s6 + $0x18] sm:$0xf]
        %v1439 = vld [vmem:[%s6 + $0x1c] sm:$0xf]
        %v1440 = vld [vmem:[%s6 + $0x20] sm:$0xf]
        %v1441 = vld [vmem:[%s6 + $0x24] sm:$0xf]
        %v1442 = vld [vmem:[%s6 + $0x28] sm:$0xf]
        %v1443 = vld [vmem:[%s6 + $0x2c] sm:$0xf]
        %s1444 = scalar_lea.vmem %s6, 48
        %v1445 = vld [vmem:[%s1444] sm:$0xf]
        %v1446 = vld [vmem:[%s1444 + $0x4] sm:$0xf]
        %v1447 = vld [vmem:[%s1444 + $0x8] sm:$0xf]
        %v1448 = vld [vmem:[%s1444 + $0xc] sm:$0xf]
        %v1449 = vld [vmem:[%s1444 + $0x10] sm:$0xf]
        %v1450 = vld [vmem:[%s1444 + $0x14] sm:$0xf]
        %v1451 = vld [vmem:[%s1444 + $0x18] sm:$0xf]
        %v1452 = vld [vmem:[%s1444 + $0x1c] sm:$0xf]
        %v1453 = vld [vmem:[%s1444 + $0x20] sm:$0xf]
        %v1454 = vld [vmem:[%s1444 + $0x24] sm:$0xf]
        %v1455 = vld [vmem:[%s1444 + $0x28] sm:$0xf]
        %v1456 = vld [vmem:[%s1444 + $0x2c] sm:$0xf]
        %v1469 = vunpack.c.l.b16 %v1445
        %v1470 = vunpack.c.l.b16 %v1446
        %v1471 = vunpack.c.l.b16 %v1447
        %v1472 = vunpack.c.l.b16 %v1448
        %v1473 = vunpack.c.l.b16 %v1449
        %v1474 = vunpack.c.l.b16 %v1450
        %v1475 = vunpack.c.l.b16 %v1451
        %v1476 = vunpack.c.l.b16 %v1452
        %v1477 = vunpack.c.l.b16 %v1453
        %v1478 = vunpack.c.l.b16 %v1454
        %v1479 = vunpack.c.l.b16 %v1455
        %v1480 = vunpack.c.l.b16 %v1456
        %v1481 = vpack.c.b16 %v1470, %v1469
        %v1482 = vpack.c.b16 %v1472, %v1471
        %v1483 = vpack.c.b16 %v1474, %v1473
        %v1484 = vpack.c.b16 %v1476, %v1475
        %v1485 = vpack.c.b16 %v1478, %v1477
        %v1486 = vpack.c.b16 %v1480, %v1479
        %vm1493 = vcmask 785408
        %v1494 = vsel %vm1493, %v1415, 0
        %v1496 = vsel %vm1493, %v1417, 0
        %v1498 = vsel %vm1493, %v1419, 0
        %v1500 = vsel %vm1493, %v1421, 0
        %v1502 = vsel %vm1493, %v1423, 0
        %v1504 = vsel %vm1493, %v1425, 0
        %v1506 = vsel %vm1493, %v1427, 0
        %v1508 = vsel %vm1493, %v1429, 0
        %1510 = vmatprep.subr.bf16.mxu0 0
        %1511 = vmatpush1.bf16.msra.mxu0 0
        %1512 = vmatprep.subr.bf16.mxu0 0
        %1513 = vmatpush1.bf16.msra.mxu0 0
        %1514 = vmatprep.subr.bf16.mxu0 0
        %1515 = vmatpush1.bf16.msra.mxu0 %v1486
        %1516 = vmatprep.subr.bf16.mxu0 0
        %1517 = vmatpush1.bf16.msra.mxu0 %v1485
        %1518 = vmatprep.subr.bf16.mxu0 0
        %1519 = vmatpush1.bf16.msra.mxu0 %v1484
        %1520 = vmatprep.subr.bf16.mxu0 0
        %1521 = vmatpush1.bf16.msra.mxu0 %v1483
        %1522 = vmatprep.subr.bf16.mxu0 0
        %1523 = vmatpush1.bf16.msra.mxu0 %v1482
        %1524 = vmatprep.subr.bf16.mxu0 0
        %1525 = vmatpush1.bf16.msra.mxu0 %v1481
        %1526 = vmatprep.subr.bf16.mxu0 0
        %1527 = vmatpush2.bf16.msra.mxu0 0
        %1528 = vmatprep.subr.bf16.mxu0 0
        %1529 = vmatpush2.bf16.msra.mxu0 0
        %1530 = vmatprep.subr.bf16.mxu0 0
        %1531 = vmatpush2.bf16.msra.mxu0 0
        %1532 = vmatprep.subr.bf16.mxu0 0
        %1533 = vmatpush2.bf16.msra.mxu0 0
        %1534 = vmatprep.subr.bf16.mxu0 0
        %1535 = vmatpush2.bf16.msra.mxu0 0
        %1536 = vmatprep.subr.bf16.mxu0 0
        %1537 = vmatpush2.bf16.msra.mxu0 0
        %1538 = vmatprep.subr.bf16.mxu0 0
        %1539 = vmatpush2.bf16.msra.mxu0 0
        %1540 = vmatprep.subr.bf16.mxu0 0
        %1541 = vmatpush2.bf16.msra.mxu0 0
        %1542 = vmatprep.mubr.bf16.mxu0 0
        %1543 = vmatmul.mubr.bf16.gmra.mxu0 %v1494
        %v1544 = vpop.f32.mrf.mxu0
        %v1545 = vadd.f32 0.0, %v1544
        %v1546 = vpop.f32.mrf.mxu0
        %v1547 = vpop.f32.mrf.mxu0
        %v1548 = vadd.f32 0.0, %v1547
        %v1549 = vpop.f32.mrf.mxu0
        %1550 = vmatprep.mubr.bf16.mxu0 0
        %1551 = vmatmul.mubr.bf16.gmra.mxu0 %v1496
        %v1552 = vpop.f32.mrf.mxu0
        %v1553 = vadd.f32 0.0, %v1552
        %v1554 = vpop.f32.mrf.mxu0
        %v1555 = vpop.f32.mrf.mxu0
        %v1556 = vadd.f32 0.0, %v1555
        %v1557 = vpop.f32.mrf.mxu0
        %1558 = vmatprep.mubr.bf16.mxu0 0
        %1559 = vmatmul.mubr.bf16.gmra.mxu0 %v1498
        %v1560 = vpop.f32.mrf.mxu0
        %v1561 = vadd.f32 0.0, %v1560
        %v1562 = vpop.f32.mrf.mxu0
        %v1563 = vpop.f32.mrf.mxu0
        %v1564 = vadd.f32 0.0, %v1563
        %v1565 = vpop.f32.mrf.mxu0
        %1566 = vmatprep.mubr.bf16.mxu0 0
        %1567 = vmatmul.mubr.bf16.gmra.mxu0 %v1500
        %v1568 = vpop.f32.mrf.mxu0
        %v1569 = vadd.f32 0.0, %v1568
        %v1570 = vpop.f32.mrf.mxu0
        %v1571 = vpop.f32.mrf.mxu0
        %v1572 = vadd.f32 0.0, %v1571
        %v1573 = vpop.f32.mrf.mxu0
        %1574 = vmatprep.mubr.bf16.mxu0 0
        %1575 = vmatmul.mubr.bf16.gmra.mxu0 %v1502
        %v1576 = vpop.f32.mrf.mxu0
        %v1577 = vadd.f32 0.0, %v1576
        %v1578 = vpop.f32.mrf.mxu0
        %v1579 = vpop.f32.mrf.mxu0
        %v1580 = vadd.f32 0.0, %v1579
        %v1581 = vpop.f32.mrf.mxu0
        %1582 = vmatprep.mubr.bf16.mxu0 0
        %1583 = vmatmul.mubr.bf16.gmra.mxu0 %v1504
        %v1584 = vpop.f32.mrf.mxu0
        %v1585 = vadd.f32 0.0, %v1584
        %v1586 = vpop.f32.mrf.mxu0
        %v1587 = vpop.f32.mrf.mxu0
        %v1588 = vadd.f32 0.0, %v1587
        %v1589 = vpop.f32.mrf.mxu0
        %1590 = vmatprep.mubr.bf16.mxu0 0
        %1591 = vmatmul.mubr.bf16.gmra.mxu0 %v1506
        %v1592 = vpop.f32.mrf.mxu0
        %v1593 = vadd.f32 0.0, %v1592
        %v1594 = vpop.f32.mrf.mxu0
        %v1595 = vpop.f32.mrf.mxu0
        %v1596 = vadd.f32 0.0, %v1595
        %v1597 = vpop.f32.mrf.mxu0
        %1598 = vmatprep.mubr.bf16.mxu0 0
        %1599 = vmatmul.mubr.bf16.gmra.mxu0 %v1508
        %v1600 = vpop.f32.mrf.mxu0
        %v1601 = vadd.f32 0.0, %v1600
        %v1602 = vpop.f32.mrf.mxu0
        %v1603 = vpop.f32.mrf.mxu0
        %v1604 = vadd.f32 0.0, %v1603
        %v1605 = vpop.f32.mrf.mxu0
        %1606 = vdwg.mxu0
        %v1619 = vunpack.c.l.b16 %v1432
        %v1620 = vunpack.c.l.b16 %v1433
        %v1621 = vunpack.c.l.b16 %v1434
        %v1622 = vunpack.c.l.b16 %v1435
        %v1623 = vunpack.c.l.b16 %v1436
        %v1624 = vunpack.c.l.b16 %v1437
        %v1625 = vunpack.c.l.b16 %v1438
        %v1626 = vunpack.c.l.b16 %v1439
        %v1627 = vunpack.c.l.b16 %v1440
        %v1628 = vunpack.c.l.b16 %v1441
        %v1629 = vunpack.c.l.b16 %v1442
        %v1630 = vunpack.c.l.b16 %v1443
        %v1631 = vpack.c.b16 %v1620, %v1619
        %v1632 = vpack.c.b16 %v1622, %v1621
        %v1633 = vpack.c.b16 %v1624, %v1623
        %v1634 = vpack.c.b16 %v1626, %v1625
        %v1635 = vpack.c.b16 %v1628, %v1627
        %v1636 = vpack.c.b16 %v1630, %v1629
        %v1643 = vsel %vm1493, %v1413, 0
        %1645 = vmatprep.subr.bf16.mxu0 0
        %1646 = vmatpush1.bf16.msra.mxu0 0
        %1647 = vmatprep.subr.bf16.mxu0 0
        %1648 = vmatpush1.bf16.msra.mxu0 0
        %1649 = vmatprep.subr.bf16.mxu0 0
        %1650 = vmatpush1.bf16.msra.mxu0 %v1636
        %1651 = vmatprep.subr.bf16.mxu0 0
        %1652 = vmatpush1.bf16.msra.mxu0 %v1635
        %1653 = vmatprep.subr.bf16.mxu0 0
        %1654 = vmatpush1.bf16.msra.mxu0 %v1634
        %1655 = vmatprep.subr.bf16.mxu0 0
        %1656 = vmatpush1.bf16.msra.mxu0 %v1633
        %1657 = vmatprep.subr.bf16.mxu0 0
        %1658 = vmatpush1.bf16.msra.mxu0 %v1632
        %1659 = vmatprep.subr.bf16.mxu0 0
        %1660 = vmatpush1.bf16.msra.mxu0 %v1631
        %1661 = vmatprep.subr.bf16.mxu0 0
        %1662 = vmatpush2.bf16.msra.mxu0 0
        %1663 = vmatprep.subr.bf16.mxu0 0
        %1664 = vmatpush2.bf16.msra.mxu0 0
        %1665 = vmatprep.subr.bf16.mxu0 0
        %1666 = vmatpush2.bf16.msra.mxu0 0
        %1667 = vmatprep.subr.bf16.mxu0 0
        %1668 = vmatpush2.bf16.msra.mxu0 0
        %1669 = vmatprep.subr.bf16.mxu0 0
        %1670 = vmatpush2.bf16.msra.mxu0 0
        %1671 = vmatprep.subr.bf16.mxu0 0
        %1672 = vmatpush2.bf16.msra.mxu0 0
        %1673 = vmatprep.subr.bf16.mxu0 0
        %1674 = vmatpush2.bf16.msra.mxu0 0
        %1675 = vmatprep.subr.bf16.mxu0 0
        %1676 = vmatpush2.bf16.msra.mxu0 0
        %1677 = vmatprep.mubr.bf16.mxu0 0
        %1678 = vmatmul.mubr.bf16.gmra.mxu0 %v1643
        %v1679 = vpop.f32.mrf.mxu0
        %v1680 = vadd.f32 %v1545, %v1679
        %v1681 = vpop.f32.mrf.mxu0
        %v1682 = vpop.f32.mrf.mxu0
        %v1683 = vadd.f32 %v1548, %v1682
        %v1684 = vpop.f32.mrf.mxu0
        %1685 = vmatprep.mubr.bf16.mxu0 0
        %1686 = vmatmul.mubr.bf16.gmra.mxu0 %v1494
        %v1687 = vpop.f32.mrf.mxu0
        %v1688 = vadd.f32 %v1553, %v1687
        %v1689 = vpop.f32.mrf.mxu0
        %v1690 = vpop.f32.mrf.mxu0
        %v1691 = vadd.f32 %v1556, %v1690
        %v1692 = vpop.f32.mrf.mxu0
        %1693 = vmatprep.mubr.bf16.mxu0 0
        %1694 = vmatmul.mubr.bf16.gmra.mxu0 %v1496
        %v1695 = vpop.f32.mrf.mxu0
        %v1696 = vadd.f32 %v1561, %v1695
        %v1697 = vpop.f32.mrf.mxu0
        %v1698 = vpop.f32.mrf.mxu0
        %v1699 = vadd.f32 %v1564, %v1698
        %v1700 = vpop.f32.mrf.mxu0
        %1701 = vmatprep.mubr.bf16.mxu0 0
        %1702 = vmatmul.mubr.bf16.gmra.mxu0 %v1498
        %v1703 = vpop.f32.mrf.mxu0
        %v1704 = vadd.f32 %v1569, %v1703
        %v1705 = vpop.f32.mrf.mxu0
        %v1706 = vpop.f32.mrf.mxu0
        %v1707 = vadd.f32 %v1572, %v1706
        %v1708 = vpop.f32.mrf.mxu0
        %1709 = vmatprep.mubr.bf16.mxu0 0
        %1710 = vmatmul.mubr.bf16.gmra.mxu0 %v1500
        %v1711 = vpop.f32.mrf.mxu0
        %v1712 = vadd.f32 %v1577, %v1711
        %v1713 = vpop.f32.mrf.mxu0
        %v1714 = vpop.f32.mrf.mxu0
        %v1715 = vadd.f32 %v1580, %v1714
        %v1716 = vpop.f32.mrf.mxu0
        %1717 = vmatprep.mubr.bf16.mxu0 0
        %1718 = vmatmul.mubr.bf16.gmra.mxu0 %v1502
        %v1719 = vpop.f32.mrf.mxu0
        %v1720 = vadd.f32 %v1585, %v1719
        %v1721 = vpop.f32.mrf.mxu0
        %v1722 = vpop.f32.mrf.mxu0
        %v1723 = vadd.f32 %v1588, %v1722
        %v1724 = vpop.f32.mrf.mxu0
        %1725 = vmatprep.mubr.bf16.mxu0 0
        %1726 = vmatmul.mubr.bf16.gmra.mxu0 %v1504
        %v1727 = vpop.f32.mrf.mxu0
        %v1728 = vadd.f32 %v1593, %v1727
        %v1729 = vpop.f32.mrf.mxu0
        %v1730 = vpop.f32.mrf.mxu0
        %v1731 = vadd.f32 %v1596, %v1730
        %v1732 = vpop.f32.mrf.mxu0
        %1733 = vmatprep.mubr.bf16.mxu0 0
        %1734 = vmatmul.mubr.bf16.gmra.mxu0 %v1506
        %v1735 = vpop.f32.mrf.mxu0
        %v1736 = vadd.f32 %v1601, %v1735
        %v1737 = vpop.f32.mrf.mxu0
        %v1738 = vpop.f32.mrf.mxu0
        %v1739 = vadd.f32 %v1604, %v1738
        %v1740 = vpop.f32.mrf.mxu0
        %1741 = vdwg.mxu0
        %s1742 = scalar_lea.vmem %s6, 96
        %v1743 = vld [vmem:[%s1742] sm:$0xf]
        %v1744 = vld [vmem:[%s1742 + $0x4] sm:$0xf]
        %v1745 = vld [vmem:[%s1742 + $0x8] sm:$0xf]
        %v1746 = vld [vmem:[%s1742 + $0xc] sm:$0xf]
        %v1747 = vld [vmem:[%s1742 + $0x10] sm:$0xf]
        %v1748 = vld [vmem:[%s1742 + $0x14] sm:$0xf]
        %v1749 = vld [vmem:[%s1742 + $0x18] sm:$0xf]
        %v1750 = vld [vmem:[%s1742 + $0x1c] sm:$0xf]
        %v1751 = vld [vmem:[%s1742 + $0x20] sm:$0xf]
        %v1752 = vld [vmem:[%s1742 + $0x24] sm:$0xf]
        %v1753 = vld [vmem:[%s1742 + $0x28] sm:$0xf]
        %v1754 = vld [vmem:[%s1742 + $0x2c] sm:$0xf]
        %v1767 = vunpack.c.l.b16 %v1743
        %v1768 = vunpack.c.l.b16 %v1744
        %v1769 = vunpack.c.l.b16 %v1745
        %v1770 = vunpack.c.l.b16 %v1746
        %v1771 = vunpack.c.l.b16 %v1747
        %v1772 = vunpack.c.l.b16 %v1748
        %v1773 = vunpack.c.l.b16 %v1749
        %v1774 = vunpack.c.l.b16 %v1750
        %v1775 = vunpack.c.l.b16 %v1751
        %v1776 = vunpack.c.l.b16 %v1752
        %v1777 = vunpack.c.l.b16 %v1753
        %v1778 = vunpack.c.l.b16 %v1754
        %v1779 = vpack.c.b16 %v1768, %v1767
        %v1780 = vpack.c.b16 %v1770, %v1769
        %v1781 = vpack.c.b16 %v1772, %v1771
        %v1782 = vpack.c.b16 %v1774, %v1773
        %v1783 = vpack.c.b16 %v1776, %v1775
        %v1784 = vpack.c.b16 %v1778, %v1777
        %v1791 = vsel %vm1493, %v1431, 0
        %1793 = vmatprep.subr.bf16.mxu0 0
        %1794 = vmatpush1.bf16.msra.mxu0 0
        %1795 = vmatprep.subr.bf16.mxu0 0
        %1796 = vmatpush1.bf16.msra.mxu0 0
        %1797 = vmatprep.subr.bf16.mxu0 0
        %1798 = vmatpush1.bf16.msra.mxu0 %v1784
        %1799 = vmatprep.subr.bf16.mxu0 0
        %1800 = vmatpush1.bf16.msra.mxu0 %v1783
        %1801 = vmatprep.subr.bf16.mxu0 0
        %1802 = vmatpush1.bf16.msra.mxu0 %v1782
        %1803 = vmatprep.subr.bf16.mxu0 0
        %1804 = vmatpush1.bf16.msra.mxu0 %v1781
        %1805 = vmatprep.subr.bf16.mxu0 0
        %1806 = vmatpush1.bf16.msra.mxu0 %v1780
        %1807 = vmatprep.subr.bf16.mxu0 0
        %1808 = vmatpush1.bf16.msra.mxu0 %v1779
        %1809 = vmatprep.subr.bf16.mxu0 0
        %1810 = vmatpush2.bf16.msra.mxu0 0
        %1811 = vmatprep.subr.bf16.mxu0 0
        %1812 = vmatpush2.bf16.msra.mxu0 0
        %1813 = vmatprep.subr.bf16.mxu0 0
        %1814 = vmatpush2.bf16.msra.mxu0 0
        %1815 = vmatprep.subr.bf16.mxu0 0
        %1816 = vmatpush2.bf16.msra.mxu0 0
        %1817 = vmatprep.subr.bf16.mxu0 0
        %1818 = vmatpush2.bf16.msra.mxu0 0
        %1819 = vmatprep.subr.bf16.mxu0 0
        %1820 = vmatpush2.bf16.msra.mxu0 0
        %1821 = vmatprep.subr.bf16.mxu0 0
        %1822 = vmatpush2.bf16.msra.mxu0 0
        %1823 = vmatprep.subr.bf16.mxu0 0
        %1824 = vmatpush2.bf16.msra.mxu0 0
        %1825 = vmatprep.mubr.bf16.mxu0 0
        %1826 = vmatmul.mubr.bf16.gmra.mxu0 %v1496
        %v1827 = vpop.f32.mrf.mxu0
        %v1828 = vadd.f32 0.0, %v1827
        %v1829 = vpop.f32.mrf.mxu0
        %v1830 = vpop.f32.mrf.mxu0
        %v1831 = vadd.f32 0.0, %v1830
        %v1832 = vpop.f32.mrf.mxu0
        %1833 = vmatprep.mubr.bf16.mxu0 0
        %1834 = vmatmul.mubr.bf16.gmra.mxu0 %v1498
        %v1835 = vpop.f32.mrf.mxu0
        %v1836 = vadd.f32 0.0, %v1835
        %v1837 = vpop.f32.mrf.mxu0
        %v1838 = vpop.f32.mrf.mxu0
        %v1839 = vadd.f32 0.0, %v1838
        %v1840 = vpop.f32.mrf.mxu0
        %1841 = vmatprep.mubr.bf16.mxu0 0
        %1842 = vmatmul.mubr.bf16.gmra.mxu0 %v1500
        %v1843 = vpop.f32.mrf.mxu0
        %v1844 = vadd.f32 0.0, %v1843
        %v1845 = vpop.f32.mrf.mxu0
        %v1846 = vpop.f32.mrf.mxu0
        %v1847 = vadd.f32 0.0, %v1846
        %v1848 = vpop.f32.mrf.mxu0
        %1849 = vmatprep.mubr.bf16.mxu0 0
        %1850 = vmatmul.mubr.bf16.gmra.mxu0 %v1502
        %v1851 = vpop.f32.mrf.mxu0
        %v1852 = vadd.f32 0.0, %v1851
        %v1853 = vpop.f32.mrf.mxu0
        %v1854 = vpop.f32.mrf.mxu0
        %v1855 = vadd.f32 0.0, %v1854
        %v1856 = vpop.f32.mrf.mxu0
        %1857 = vmatprep.mubr.bf16.mxu0 0
        %1858 = vmatmul.mubr.bf16.gmra.mxu0 %v1504
        %v1859 = vpop.f32.mrf.mxu0
        %v1860 = vadd.f32 0.0, %v1859
        %v1861 = vpop.f32.mrf.mxu0
        %v1862 = vpop.f32.mrf.mxu0
        %v1863 = vadd.f32 0.0, %v1862
        %v1864 = vpop.f32.mrf.mxu0
        %1865 = vmatprep.mubr.bf16.mxu0 0
        %1866 = vmatmul.mubr.bf16.gmra.mxu0 %v1506
        %v1867 = vpop.f32.mrf.mxu0
        %v1868 = vadd.f32 0.0, %v1867
        %v1869 = vpop.f32.mrf.mxu0
        %v1870 = vpop.f32.mrf.mxu0
        %v1871 = vadd.f32 0.0, %v1870
        %v1872 = vpop.f32.mrf.mxu0
        %1873 = vmatprep.mubr.bf16.mxu0 0
        %1874 = vmatmul.mubr.bf16.gmra.mxu0 %v1508
        %v1875 = vpop.f32.mrf.mxu0
        %v1876 = vadd.f32 0.0, %v1875
        %v1877 = vpop.f32.mrf.mxu0
        %v1878 = vpop.f32.mrf.mxu0
        %v1879 = vadd.f32 0.0, %v1878
        %v1880 = vpop.f32.mrf.mxu0
        %1881 = vmatprep.mubr.bf16.mxu0 0
        %1882 = vmatmul.mubr.bf16.gmra.mxu0 %v1791
        %v1883 = vpop.f32.mrf.mxu0
        %v1884 = vadd.f32 0.0, %v1883
        %v1885 = vpop.f32.mrf.mxu0
        %v1886 = vpop.f32.mrf.mxu0
        %v1887 = vadd.f32 0.0, %v1886
        %v1888 = vpop.f32.mrf.mxu0
        %1889 = vdwg.mxu0
        %v1890 = vadd.f32 %v1680, %v1828
        %v1891 = vadd.f32 %v1683, %v1831
        %v1892 = vadd.f32 %v1688, %v1836
        %v1893 = vadd.f32 %v1691, %v1839
        %v1894 = vadd.f32 %v1696, %v1844
        %v1895 = vadd.f32 %v1699, %v1847
        %v1896 = vadd.f32 %v1704, %v1852
        %v1897 = vadd.f32 %v1707, %v1855
        %v1898 = vadd.f32 %v1712, %v1860
        %v1899 = vadd.f32 %v1715, %v1863
        %v1900 = vadd.f32 %v1720, %v1868
        %v1901 = vadd.f32 %v1723, %v1871
        %v1902 = vadd.f32 %v1728, %v1876
        %v1903 = vadd.f32 %v1731, %v1879
        %v1904 = vadd.f32 %v1736, %v1884
        %v1905 = vadd.f32 %v1739, %v1887
        %v1906 = vld [vmem:[%s7] sm:$0x1]
        %v1908 = vlaneseq
        %v1909 = vshrl.u32 %v1908, 7
        %v1910 = vsub.s32 0, %v1909
        %v1911 = vrot.slane %v1906, %v1910
        %v1913 = vmul.f32 %v1890, %v1911
        %v1914 = vmul.f32 %v1891, %v1911
        %v1915 = vmul.f32 %v1892, %v1911
        %v1916 = vmul.f32 %v1893, %v1911
        %v1917 = vmul.f32 %v1894, %v1911
        %v1918 = vmul.f32 %v1895, %v1911
        %v1919 = vmul.f32 %v1896, %v1911
        %v1920 = vmul.f32 %v1897, %v1911
        %v1921 = vmul.f32 %v1898, %v1911
        %v1922 = vmul.f32 %v1899, %v1911
        %v1923 = vmul.f32 %v1900, %v1911
        %v1924 = vmul.f32 %v1901, %v1911
        %v1925 = vmul.f32 %v1902, %v1911
        %v1926 = vmul.f32 %v1903, %v1911
        %v1927 = vmul.f32 %v1904, %v1911
        %v1928 = vmul.f32 %v1905, %v1911
        %v1929 = vld [vmem:[%s8] sm:$0x1]
        %v1931 = vlaneseq
        %v1932 = vshrl.u32 %v1931, 7
        %v1933 = vsub.s32 0, %v1932
        %v1934 = vrot.slane %v1929, %v1933
        %v1936 = vadd.f32 %v1913, %v1934
        %v1937 = vadd.f32 %v1914, %v1934
        %v1938 = vadd.f32 %v1915, %v1934
        %v1939 = vadd.f32 %v1916, %v1934
        %v1940 = vadd.f32 %v1917, %v1934
        %v1941 = vadd.f32 %v1918, %v1934
        %v1942 = vadd.f32 %v1919, %v1934
        %v1943 = vadd.f32 %v1920, %v1934
        %v1944 = vadd.f32 %v1921, %v1934
        %v1945 = vadd.f32 %v1922, %v1934
        %v1946 = vadd.f32 %v1923, %v1934
        %v1947 = vadd.f32 %v1924, %v1934
        %v1948 = vadd.f32 %v1925, %v1934
        %v1949 = vadd.f32 %v1926, %v1934
        %v1950 = vadd.f32 %v1927, %v1934
        %v1951 = vadd.f32 %v1928, %v1934
        %v1952 = vmax.f32 %v1936, 0.0
        %v1953 = vmax.f32 %v1937, 0.0
        %v1954 = vmax.f32 %v1938, 0.0
        %v1955 = vmax.f32 %v1939, 0.0
        %v1956 = vmax.f32 %v1940, 0.0
        %v1957 = vmax.f32 %v1941, 0.0
        %v1958 = vmax.f32 %v1942, 0.0
        %v1959 = vmax.f32 %v1943, 0.0
        %v1960 = vmax.f32 %v1944, 0.0
        %v1961 = vmax.f32 %v1945, 0.0
        %v1962 = vmax.f32 %v1946, 0.0
        %v1963 = vmax.f32 %v1947, 0.0
        %v1964 = vmax.f32 %v1948, 0.0
        %v1965 = vmax.f32 %v1949, 0.0
        %v1966 = vmax.f32 %v1950, 0.0
        %v1967 = vmax.f32 %v1951, 0.0
        %v1968 = vpack.c.bf16 %v1953, %v1952
        %v1969 = vpack.c.bf16 %v1955, %v1954
        %v1970 = vpack.c.bf16 %v1957, %v1956
        %v1971 = vpack.c.bf16 %v1959, %v1958
        %v1972 = vpack.c.bf16 %v1961, %v1960
        %v1973 = vpack.c.bf16 %v1963, %v1962
        %v1974 = vpack.c.bf16 %v1965, %v1964
        %v1975 = vpack.c.bf16 %v1967, %v1966
        %v1976 = vld [vmem:[%s9] sm:$0xf]
        %v1977 = vld [vmem:[%s9 + $0x4] sm:$0xf]
        %v1978 = vld [vmem:[%s9 + $0x8] sm:$0xf]
        %v1979 = vld [vmem:[%s9 + $0xc] sm:$0xf]
        %v1984 = vunpack.c.l.b16 %v1976
        %v1985 = vunpack.c.l.b16 %v1977
        %v1986 = vunpack.c.l.b16 %v1978
        %v1987 = vunpack.c.l.b16 %v1979
        %v1988 = vpack.c.b16 %v1985, %v1984
        %v1989 = vpack.c.b16 %v1987, %v1986
        %v1993 = vsel %vm1380, %v1968, 0
        %v1996 = vsel %vm1380, %v1969, 0
        %v1999 = vsel %vm1380, %v1970, 0
        %v2002 = vsel %vm1380, %v1971, 0
        %v2005 = vsel %vm1380, %v1972, 0
        %v2008 = vsel %vm1380, %v1973, 0
        %v2011 = vsel %vm1380, %v1974, 0
        %v2014 = vsel %vm1380, %v1975, 0
        %2016 = vmatprep.subr.bf16.mxu0 0
        %2017 = vmatpush1.bf16.msra.mxu0 0
        %2018 = vmatprep.subr.bf16.mxu0 0
        %2019 = vmatpush1.bf16.msra.mxu0 0
        %2020 = vmatprep.subr.bf16.mxu0 0
        %2021 = vmatpush1.bf16.msra.mxu0 0
        %2022 = vmatprep.subr.bf16.mxu0 0
        %2023 = vmatpush1.bf16.msra.mxu0 0
        %2024 = vmatprep.subr.bf16.mxu0 0
        %2025 = vmatpush1.bf16.msra.mxu0 0
        %2026 = vmatprep.subr.bf16.mxu0 0
        %2027 = vmatpush1.bf16.msra.mxu0 0
        %2028 = vmatprep.subr.bf16.mxu0 0
        %2029 = vmatpush1.bf16.msra.mxu0 %v1989
        %2030 = vmatprep.subr.bf16.mxu0 0
        %2031 = vmatpush1.bf16.msra.mxu0 %v1988
        %2032 = vmatprep.subr.bf16.mxu0 0
        %2033 = vmatpush2.bf16.msra.mxu0 0
        %2034 = vmatprep.subr.bf16.mxu0 0
        %2035 = vmatpush2.bf16.msra.mxu0 0
        %2036 = vmatprep.subr.bf16.mxu0 0
        %2037 = vmatpush2.bf16.msra.mxu0 0
        %2038 = vmatprep.subr.bf16.mxu0 0
        %2039 = vmatpush2.bf16.msra.mxu0 0
        %2040 = vmatprep.subr.bf16.mxu0 0
        %2041 = vmatpush2.bf16.msra.mxu0 0
        %2042 = vmatprep.subr.bf16.mxu0 0
        %2043 = vmatpush2.bf16.msra.mxu0 0
        %2044 = vmatprep.subr.bf16.mxu0 0
        %2045 = vmatpush2.bf16.msra.mxu0 0
        %2046 = vmatprep.subr.bf16.mxu0 0
        %2047 = vmatpush2.bf16.msra.mxu0 0
        %2048 = vmatprep.mubr.bf16.mxu0 0
        %2049 = vmatmul.mubr.bf16.gmra.mxu0 %v1993
        %v2050 = vpop.f32.mrf.mxu0
        %v2051 = vadd.f32 0.0, %v2050
        %v2052 = vpop.f32.mrf.mxu0
        %v2053 = vpop.f32.mrf.mxu0
        %v2054 = vadd.f32 0.0, %v2053
        %v2055 = vpop.f32.mrf.mxu0
        %2056 = vmatprep.mubr.bf16.mxu0 0
        %2057 = vmatmul.mubr.bf16.gmra.mxu0 %v1996
        %v2058 = vpop.f32.mrf.mxu0
        %v2059 = vadd.f32 0.0, %v2058
        %v2060 = vpop.f32.mrf.mxu0
        %v2061 = vpop.f32.mrf.mxu0
        %v2062 = vadd.f32 0.0, %v2061
        %v2063 = vpop.f32.mrf.mxu0
        %2064 = vmatprep.mubr.bf16.mxu0 0
        %2065 = vmatmul.mubr.bf16.gmra.mxu0 %v1999
        %v2066 = vpop.f32.mrf.mxu0
        %v2067 = vadd.f32 0.0, %v2066
        %v2068 = vpop.f32.mrf.mxu0
        %v2069 = vpop.f32.mrf.mxu0
        %v2070 = vadd.f32 0.0, %v2069
        %v2071 = vpop.f32.mrf.mxu0
        %2072 = vmatprep.mubr.bf16.mxu0 0
        %2073 = vmatmul.mubr.bf16.gmra.mxu0 %v2002
        %v2074 = vpop.f32.mrf.mxu0
        %v2075 = vadd.f32 0.0, %v2074
        %v2076 = vpop.f32.mrf.mxu0
        %v2077 = vpop.f32.mrf.mxu0
        %v2078 = vadd.f32 0.0, %v2077
        %v2079 = vpop.f32.mrf.mxu0
        %2080 = vmatprep.mubr.bf16.mxu0 0
        %2081 = vmatmul.mubr.bf16.gmra.mxu0 %v2005
        %v2082 = vpop.f32.mrf.mxu0
        %v2083 = vadd.f32 0.0, %v2082
        %v2084 = vpop.f32.mrf.mxu0
        %v2085 = vpop.f32.mrf.mxu0
        %v2086 = vadd.f32 0.0, %v2085
        %v2087 = vpop.f32.mrf.mxu0
        %2088 = vmatprep.mubr.bf16.mxu0 0
        %2089 = vmatmul.mubr.bf16.gmra.mxu0 %v2008
        %v2090 = vpop.f32.mrf.mxu0
        %v2091 = vadd.f32 0.0, %v2090
        %v2092 = vpop.f32.mrf.mxu0
        %v2093 = vpop.f32.mrf.mxu0
        %v2094 = vadd.f32 0.0, %v2093
        %v2095 = vpop.f32.mrf.mxu0
        %2096 = vmatprep.mubr.bf16.mxu0 0
        %2097 = vmatmul.mubr.bf16.gmra.mxu0 %v2011
        %v2098 = vpop.f32.mrf.mxu0
        %v2099 = vadd.f32 0.0, %v2098
        %v2100 = vpop.f32.mrf.mxu0
        %v2101 = vpop.f32.mrf.mxu0
        %v2102 = vadd.f32 0.0, %v2101
        %v2103 = vpop.f32.mrf.mxu0
        %2104 = vmatprep.mubr.bf16.mxu0 0
        %2105 = vmatmul.mubr.bf16.gmra.mxu0 %v2014
        %v2106 = vpop.f32.mrf.mxu0
        %v2107 = vadd.f32 0.0, %v2106
        %v2108 = vpop.f32.mrf.mxu0
        %v2109 = vpop.f32.mrf.mxu0
        %v2110 = vadd.f32 0.0, %v2109
        %v2111 = vpop.f32.mrf.mxu0
        %2112 = vdwg.mxu0
        %v2113 = vld [vmem:[%s10] sm:$0x1]
        %v2115 = vlaneseq
        %v2116 = vshrl.u32 %v2115, 7
        %v2117 = vsub.s32 0, %v2116
        %v2118 = vrot.slane %v2113, %v2117
        %v2120 = vmul.f32 %v2051, %v2118
        %v2121 = vmul.f32 %v2054, %v2118
        %v2122 = vmul.f32 %v2059, %v2118
        %v2123 = vmul.f32 %v2062, %v2118
        %v2124 = vmul.f32 %v2067, %v2118
        %v2125 = vmul.f32 %v2070, %v2118
        %v2126 = vmul.f32 %v2075, %v2118
        %v2127 = vmul.f32 %v2078, %v2118
        %v2128 = vmul.f32 %v2083, %v2118
        %v2129 = vmul.f32 %v2086, %v2118
        %v2130 = vmul.f32 %v2091, %v2118
        %v2131 = vmul.f32 %v2094, %v2118
        %v2132 = vmul.f32 %v2099, %v2118
        %v2133 = vmul.f32 %v2102, %v2118
        %v2134 = vmul.f32 %v2107, %v2118
        %v2135 = vmul.f32 %v2110, %v2118
        %v2136 = vld [vmem:[%s11] sm:$0x1]
        %v2138 = vlaneseq
        %v2139 = vshrl.u32 %v2138, 7
        %v2140 = vsub.s32 0, %v2139
        %v2141 = vrot.slane %v2136, %v2140
        %v2143 = vadd.f32 %v2120, %v2141
        %v2144 = vadd.f32 %v2121, %v2141
        %v2145 = vadd.f32 %v2122, %v2141
        %v2146 = vadd.f32 %v2123, %v2141
        %v2147 = vadd.f32 %v2124, %v2141
        %v2148 = vadd.f32 %v2125, %v2141
        %v2149 = vadd.f32 %v2126, %v2141
        %v2150 = vadd.f32 %v2127, %v2141
        %v2151 = vadd.f32 %v2128, %v2141
        %v2152 = vadd.f32 %v2129, %v2141
        %v2153 = vadd.f32 %v2130, %v2141
        %v2154 = vadd.f32 %v2131, %v2141
        %v2155 = vadd.f32 %v2132, %v2141
        %v2156 = vadd.f32 %v2133, %v2141
        %v2157 = vadd.f32 %v2134, %v2141
        %v2158 = vadd.f32 %v2135, %v2141
        %v2159 = vunpack.c.l.bf16 %v567
        %v2160 = vunpack.c.l.bf16 %v568
        %v2161 = vunpack.c.l.bf16 %v569
        %v2162 = vunpack.c.l.bf16 %v570
        %v2163 = vunpack.c.l.bf16 %v571
        %v2164 = vunpack.c.l.bf16 %v572
        %v2165 = vunpack.c.l.bf16 %v573
        %v2166 = vunpack.c.l.bf16 %v574
        %v2167 = vunpack.c.l.bf16 %v575
        %v2168 = vunpack.c.l.bf16 %v576
        %v2169 = vunpack.c.l.bf16 %v577
        %v2170 = vunpack.c.l.bf16 %v578
        %v2171 = vunpack.c.l.bf16 %v579
        %v2172 = vunpack.c.l.bf16 %v580
        %v2173 = vunpack.c.l.bf16 %v581
        %v2174 = vunpack.c.l.bf16 %v582
        %v2175 = vadd.f32 %v2143, %v2159
        %v2176 = vadd.f32 %v2144, %v2160
        %v2177 = vadd.f32 %v2145, %v2161
        %v2178 = vadd.f32 %v2146, %v2162
        %v2179 = vadd.f32 %v2147, %v2163
        %v2180 = vadd.f32 %v2148, %v2164
        %v2181 = vadd.f32 %v2149, %v2165
        %v2182 = vadd.f32 %v2150, %v2166
        %v2183 = vadd.f32 %v2151, %v2167
        %v2184 = vadd.f32 %v2152, %v2168
        %v2185 = vadd.f32 %v2153, %v2169
        %v2186 = vadd.f32 %v2154, %v2170
        %v2187 = vadd.f32 %v2155, %v2171
        %v2188 = vadd.f32 %v2156, %v2172
        %v2189 = vadd.f32 %v2157, %v2173
        %v2190 = vadd.f32 %v2158, %v2174
        %v2191 = vmax.f32 %v2175, 0.0
        %v2192 = vmax.f32 %v2176, 0.0
        %v2193 = vmax.f32 %v2177, 0.0
        %v2194 = vmax.f32 %v2178, 0.0
        %v2195 = vmax.f32 %v2179, 0.0
        %v2196 = vmax.f32 %v2180, 0.0
        %v2197 = vmax.f32 %v2181, 0.0
        %v2198 = vmax.f32 %v2182, 0.0
        %v2199 = vmax.f32 %v2183, 0.0
        %v2200 = vmax.f32 %v2184, 0.0
        %v2201 = vmax.f32 %v2185, 0.0
        %v2202 = vmax.f32 %v2186, 0.0
        %v2203 = vmax.f32 %v2187, 0.0
        %v2204 = vmax.f32 %v2188, 0.0
        %v2205 = vmax.f32 %v2189, 0.0
        %v2206 = vmax.f32 %v2190, 0.0
        %v2207 = vpack.c.bf16 %v2192, %v2191
        %v2208 = vpack.c.bf16 %v2194, %v2193
        %v2209 = vpack.c.bf16 %v2196, %v2195
        %v2210 = vpack.c.bf16 %v2198, %v2197
        %v2211 = vpack.c.bf16 %v2200, %v2199
        %v2212 = vpack.c.bf16 %v2202, %v2201
        %v2213 = vpack.c.bf16 %v2204, %v2203
        %v2214 = vpack.c.bf16 %v2206, %v2205
        %v2223 = vunpack.c.l.b16 %v2207
        %v2224 = vunpack.c.h.b16 %v2207
        %v2225 = vunpack.c.l.b16 %v2208
        %v2226 = vunpack.c.h.b16 %v2208
        %v2227 = vunpack.c.l.b16 %v2209
        %v2228 = vunpack.c.h.b16 %v2209
        %v2229 = vunpack.c.l.b16 %v2210
        %v2230 = vunpack.c.h.b16 %v2210
        %v2231 = vunpack.c.l.b16 %v2211
        %v2232 = vunpack.c.h.b16 %v2211
        %v2233 = vunpack.c.l.b16 %v2212
        %v2234 = vunpack.c.h.b16 %v2212
        %v2235 = vunpack.c.l.b16 %v2213
        %v2236 = vunpack.c.h.b16 %v2213
        %v2237 = vunpack.c.l.b16 %v2214
        %v2238 = vunpack.c.h.b16 %v2214
        %v2239 = vpack.c.b16 %v2223, %v2223
        %v2240 = vpack.c.b16 %v2224, %v2224
        %v2241 = vpack.c.b16 %v2225, %v2225
        %v2242 = vpack.c.b16 %v2226, %v2226
        %v2243 = vpack.c.b16 %v2227, %v2227
        %v2244 = vpack.c.b16 %v2228, %v2228
        %v2245 = vpack.c.b16 %v2229, %v2229
        %v2246 = vpack.c.b16 %v2230, %v2230
        %v2247 = vpack.c.b16 %v2231, %v2231
        %v2248 = vpack.c.b16 %v2232, %v2232
        %v2249 = vpack.c.b16 %v2233, %v2233
        %v2250 = vpack.c.b16 %v2234, %v2234
        %v2251 = vpack.c.b16 %v2235, %v2235
        %v2252 = vpack.c.b16 %v2236, %v2236
        %v2253 = vpack.c.b16 %v2237, %v2237
        %v2254 = vpack.c.b16 %v2238, %v2238
        %2271 = vst [vmem:[%s545] sm:$0xf] %v2239
        %2272 = vst [vmem:[%s545 + $0x4] sm:$0xf] %v2240
        %2273 = vst [vmem:[%s545 + $0x8] sm:$0xf] %v2241
        %2274 = vst [vmem:[%s545 + $0xc] sm:$0xf] %v2242
        %2275 = vst [vmem:[%s545 + $0x10] sm:$0xf] %v2243
        %2276 = vst [vmem:[%s545 + $0x14] sm:$0xf] %v2244
        %2277 = vst [vmem:[%s545 + $0x18] sm:$0xf] %v2245
        %2278 = vst [vmem:[%s545 + $0x1c] sm:$0xf] %v2246
        %2279 = vst [vmem:[%s545 + $0x20] sm:$0xf] %v2247
        %2280 = vst [vmem:[%s545 + $0x24] sm:$0xf] %v2248
        %2281 = vst [vmem:[%s545 + $0x28] sm:$0xf] %v2249
        %2282 = vst [vmem:[%s545 + $0x2c] sm:$0xf] %v2250
        %2283 = vst [vmem:[%s545 + $0x30] sm:$0xf] %v2251
        %2284 = vst [vmem:[%s545 + $0x34] sm:$0xf] %v2252
        %2285 = vst [vmem:[%s545 + $0x38] sm:$0xf] %v2253
        %2286 = vst [vmem:[%s545 + $0x3c] sm:$0xf] %v2254
        %s2287 = sand.u32 %s343, 1
        %s2288 = scalar_lea.sflag [#allocation5], %s2287
        %s2289 = sand.u32 %s343, 1
        %s2290 = smul.addr %s2289, 64
        %s2291 = scalar_lea.vmem [#allocation8], %s2290
        // Predicated region
        $region77: #{tpu_custom_call.1} parent=67 // pred_check
          %p2292 = pneg %p353
        $region78: #{tpu_custom_call.1} parent=67 // pred_check_branch
          %2294 = sbr.rel (%p2292) target = $region80
        $region79: #{tpu_custom_call.1} parent=67 // pred_region
          %s2295 = smul.u32 8, %s37
          %s2297 = ssub.s32 1024, 1024
          %2298 = vsyncadd %s2288, %s2297
          %s2299 = smul.addr %s2295, 2
          %s2300 = smul.addr %s36, 32
          %s2301 = sadd.s32 %s2299, %s2300
          %s2302 = smul.addr %s2301, 64
          %s2303 = scalar_lea.hbm %s12, %s2302
          %s2304 = sshll.u32 %s2291, 4
          %s2305 = int_to_ptr.vmem [resolvable:$true] %s2304
          %2310 = dma.vmem_to_hbm [thread:$0]  %s2305, 1024, %s2303, %s2288, 64, 64, 4
        $region80: #{tpu_custom_call.1} parent=67 // pred_fallthru
          _
      $region68: #{tpu_custom_call.1} parent=5 // pred_fallthru
        _
      %p2311 = scmp.le.s32.totalorder 2, %s27
      // Predicated region
      $region81: #{tpu_custom_call.1} parent=5 // pred_check
        %p2312 = pneg %p2311
      $region82: #{tpu_custom_call.1} parent=5 // pred_check_branch
        %2314 = sbr.rel (%p2312) target = $region84
      $region83: #{tpu_custom_call.1} parent=5 // pred_region
        %s2315 = ssub.s32 %s27, 2
        // Predicated region
        $region85: #{tpu_custom_call.1} parent=83 // pred_check
          %p2316 = pneg %p359
        $region86: #{tpu_custom_call.1} parent=83 // pred_check_branch
          %2318 = sbr.rel (%p2316) target = $region88
        $region87: #{tpu_custom_call.1} parent=83 // pred_region
          %s2319 = sand.u32 %s344, 1
          %s2320 = scalar_lea.sflag [#allocation5], %s2319
          %s2321 = sand.u32 %s344, 1
          %s2322 = smul.addr %s2321, 64
          %s2323 = scalar_lea.vmem [#allocation8], %s2322
          %2324 = dma.done %s2320, 1024
        $region88: #{tpu_custom_call.1} parent=83 // pred_fallthru
          _
      $region84: #{tpu_custom_call.1} parent=5 // pred_fallthru
        _
    $region6: #{tpu_custom_call.1} parent=1 // loop_footer
      %s31 = sadd.s32 1, %s27
    $region7: #{tpu_custom_call.1} parent=1 // loop_footer_branch
      %26 = sbr.rel target = $region3
    $region8: #{tpu_custom_call.1} parent=1 // loop_exit
      _
    %2325 = vsyncpa [#allocation4], 1
    %s2326 = scalar_lea.sflag [#allocation4], 1
    %2327 = vsyncpa %s2326, 1
    %2328 = vsyncpa [#allocation7], 1
    %s2329 = scalar_lea.sflag [#allocation7], 1
    %2330 = vsyncpa %s2329, 1
    %2331 = vsyncpa [#allocation5], 1
    %s2332 = scalar_lea.sflag [#allocation5], 1
    %2333 = vsyncpa %s2332, 1

</llo_original>
